<compile_context>
chip_gen: v5e
topology: v5e:2x2
jax: 0.10.0
libtpu: 0.0.40
codegen_flags: <defaults>
</compile_context>

<pallas_src>
import numpy as np
import jax
import jax.numpy as jnp
from jax.experimental import pallas as pl
from jax.experimental.pallas import tpu as pltpu

GRID = 14
B = 2
CLASSES = 20
C = 3 + CLASSES + 2 * GRID   # 51 channels per predictor
NPRED = 2 * B                # 4 predictors per cell
CP = NPRED * C               # 204 packed lanes [p0 | p1 | p2 | p3]
R = 4 * GRID * GRID          # 784 rows (direction x grid_x x grid_y)
W_CLASS, W_COORD, W_LINK, W_PT, W_NOPT = 1.0, 5.0, 1.0, 1.0, 0.05

LOSS_NAMES = ['pt_pexist_loss', 'pt_cls_loss', 'pt_offset_loss', 'pt_link_loss',
              'pt_loss', 'nopt_loss', 'add_pexist_nopt_loss', 'center_exist_loss',
              'center_pt_loss', 'center_nopt_loss', 'center_offset_loss',
              'total_loss']


# ---------------------------------------------------------------------------
# GT construction (data-dependent, per the reference gt_convert) -- numpy.
# ---------------------------------------------------------------------------
def gt_convert_np(bboxes, labels, W, grid_size=GRID, classes=CLASSES):
    bboxes = np.asarray(bboxes, dtype=np.float32) / float(W) * grid_size
    bboxes = bboxes[0]
    labels = np.asarray(labels)
    N = bboxes.shape[0]
    gt_ps = np.zeros((N, 4, 2), np.int64)
    gt_ps_d = np.zeros((N, 4, 2), np.float32)
    gt_cs = np.zeros((N, 2), np.float32)
    gt_cs_d = np.zeros((N, 2), np.float32)
    gt_labels = np.zeros((N, classes), np.float32)
    gt_lcx = np.zeros((N, grid_size), np.float32)
    gt_lcy = np.zeros((N, grid_size), np.float32)
    gt_lpx = np.zeros((N, 4, grid_size), np.float32)
    gt_lpy = np.zeros((N, 4, grid_size), np.float32)
    for which, b in enumerate(bboxes):          # loop over N boxes only (tiny)
        x0, y0 = int(b[0]), int(b[1])
        x1, y1 = int(b[2]), int(b[1])
        x2, y2 = int(b[0]), int(b[3])
        x3, y3 = int(b[2]), int(b[3])
        xc = int((b[0] + b[2]) / 2)
        yc = int((b[1] + b[3]) / 2)
        gt_ps[which] = [[x0, y0], [x1, y1], [x2, y2], [x3, y3]]
        gt_ps_d[which] = [[b[0] - x0, b[1] - y0], [b[2] - x1, b[1] - y1],
                          [b[0] - x2, b[3] - y2], [b[2] - x3, b[3] - y3]]
        gt_cs[which] = [xc, yc]
        gt_cs_d[which] = [(b[0] + b[2]) / 2 - xc, (b[1] + b[3]) / 2 - yc]
        gt_labels[which, int(labels[0][which])] = 1.0
        gt_lcx[which, xc] = 1.0
        gt_lcy[which, yc] = 1.0
        for i in range(4):
            gt_lpx[which, i, gt_ps[which, i, 0]] = 1.0
            gt_lpy[which, i, gt_ps[which, i, 1]] = 1.0
    return gt_ps, gt_ps_d, gt_cs, gt_cs_d, gt_labels, gt_lcx, gt_lcy, gt_lpx, gt_lpy


def build_targets(gt, grid_size=GRID):
    """Vectorized dense per-cell targets + masks.

    Reproduces the reference's quirky `which = np.where(arr == [ix, iy])[0][0]`
    lookup (first row index with ANY coordinate matching) via argmax of the
    partial-match mask; the cell is active only on an exact match.
    """
    gt_ps, gt_ps_d, gt_cs, gt_cs_d, gt_labels, gt_lcx, gt_lcy, gt_lpx, gt_lpy = gt
    G = grid_size
    N = gt_ps.shape[0]
    IX = np.arange(G)[:, None]    # (G, 1)
    IY = np.arange(G)[None, :]    # (1, G)
    ones = np.ones((N, 1), np.float32)

    corner_mask = np.zeros((4, G, G), np.float32)
    corner_tgt = np.zeros((4, G, G, C), np.float32)
    center_tgt = np.zeros((4, G, G, C), np.float32)

    cs = np.asarray(gt_cs)
    c_eq_x = cs[:, 0][:, None, None] == IX[None]          # (N, G, 1)
    c_eq_y = cs[:, 1][:, None, None] == IY[None]          # (N, 1, G)
    center_mask = (c_eq_x & c_eq_y).any(0).astype(np.float32)   # (G, G)
    wc = np.argmax(c_eq_x | c_eq_y, axis=0)                     # quirky lookup

    for d in range(4):
        ps = gt_ps[:, d]
        p_eq_x = ps[:, 0][:, None, None] == IX[None]
        p_eq_y = ps[:, 1][:, None, None] == IY[None]
        corner_mask[d] = (p_eq_x & p_eq_y).any(0)
        w = np.argmax(p_eq_x | p_eq_y, axis=0)                   # quirky lookup
        corner_rows = np.concatenate(
            [ones, gt_labels, gt_ps_d[:, d], gt_lcx, gt_lcy], axis=1)      # (N, C)
        center_rows = np.concatenate(
            [ones, gt_labels, gt_cs_d, gt_lpx[:, d], gt_lcy], axis=1)      # (N, C)
        corner_tgt[d] = corner_mask[d][..., None] * corner_rows[w]
        center_tgt[d] = center_mask[..., None] * center_rows[wc]
    return corner_mask, corner_tgt, center_mask, center_tgt


def build_packed_targets(gt):
    """Lane-packed (784, 204) target slab + (4, 784) mask matrix (host numpy)."""
    corner_mask, corner_tgt, center_mask, center_tgt = build_targets(gt)
    ctgt = corner_tgt.reshape(R, C)
    ztgt = center_tgt.reshape(R, C)
    tgt = np.concatenate([ctgt, ctgt, ztgt, ztgt], axis=1).astype(np.float32)  # (784, 204)
    m_c = corner_mask.reshape(R)
    m_z = np.broadcast_to(center_mask[None], (4, GRID, GRID)).reshape(R)
    masks = np.stack([m_c, m_z, 1.0 - m_c, 1.0 - m_z]).astype(np.float32)      # (4, 784)
    return tgt, masks


# ---------------------------------------------------------------------------
# Pallas kernel: one VALU pass + one MXU matvec batch + scalar SMEM stores.
# ---------------------------------------------------------------------------
def _loss_kernel(pred_ref, tgt_ref, mask_ref, out_ref, d_ref, rs_ref):
    # single elementwise pass over the packed slab (VALU)
    d_ref[...] = (pred_ref[...] - tgt_ref[...]) ** 2

    # all masked row-reductions on the otherwise-idle MXU:
    # rows of rs: [corner-masked, center-masked, (1-corner)-masked, (1-center)-masked]
    rs_ref[...] = jnp.dot(mask_ref[...], d_ref[...],
                          preferred_element_type=jnp.float32)     # (4, 204)

    def band(row, base):
        def s(lo, hi):
            return jnp.sum(rs_ref[row:row + 1, base + lo:base + hi])
        return (s(0, 1),                                          # p_exist
                s(1, 1 + CLASSES),                                # class
                s(1 + CLASSES, 3 + CLASSES),                      # offset
                s(3 + CLASSES, 3 + CLASSES + GRID),               # link x
                s(3 + CLASSES + GRID, 3 + CLASSES + 2 * GRID))    # link y

    e0, c0, o0, x0, y0 = band(0, 0 * C)   # corner mask, predictor 0
    e1, c1, o1, x1, y1 = band(0, 1 * C)   # corner mask, predictor 1
    e2, c2, o2, x2, y2 = band(1, 2 * C)   # center mask, predictor 2
    e3, c3, o3, x3, y3 = band(1, 3 * C)   # center mask, predictor 3

    # no-point terms: targets are zero where the mask is zero, so d holds pred^2
    nopt_pt = jnp.sum(rs_ref[2:3, 0:1]) + jnp.sum(rs_ref[2:3, C:C + 1])
    nopt_j2 = jnp.sum(rs_ref[3:4, 2 * C:2 * C + 1])

    loss1 = e0 + e1 + e2 + e3
    loss2 = W_CLASS * (c0 + c1 + c2 + c3)
    loss3 = W_COORD * (o0 + o1 + o2 + o3)
    loss4 = W_LINK * (x0 + x1 + x2 + x3) + (y0 + y1 + y2 + y3)
    loss_pt = loss1 + loss2 + loss3 + loss4
    loss_nopt = nopt_pt + 2.0 * nopt_j2
    total = W_PT * loss_pt + W_NOPT * loss_nopt
    # center_* terms always read predictor 2, once per j in {2,3} -> factor 2
    center_exist = 2.0 * (e2 + W_COORD * o2) + 2.0 * W_NOPT * nopt_j2
    center_pt = 2.0 * e2
    center_nopt = 2.0 * nopt_j2
    center_offset = 2.0 * W_COORD * o2

    losses = (loss1, loss2, loss3, loss4, loss_pt, loss_nopt,
              loss1 + W_NOPT * loss_nopt, center_exist, center_pt,
              center_nopt, center_offset, total)
    for i, v in enumerate(losses):
        out_ref[i] = v


def point_link_loss_call(pred, tgt, masks):
    vmem = pl.BlockSpec(memory_space=pltpu.MemorySpace.VMEM)
    return pl.pallas_call(
        _loss_kernel,
        in_specs=[vmem, vmem, vmem],
        out_specs=pl.BlockSpec(memory_space=pltpu.MemorySpace.SMEM),
        out_shape=jax.ShapeDtypeStruct((12,), jnp.float32),
        scratch_shapes=[pltpu.VMEM((R, CP), jnp.float32),      # d = (pred - tgt)^2
                        pltpu.VMEM((NPRED, CP), jnp.float32)], # masked row sums
        compiler_params=pltpu.CompilerParams(vmem_limit_bytes=8 * 1024 * 1024),
    )(pred, tgt, masks)


@jax.jit
def _loss_jit(out_four, tgt, masks):
    # Pure metadata reshape (4,14,14,4,51) -> (784, 204); fused with the
    # pallas_call in one XLA program, so no separate transpose/copy pass.
    pred = out_four.astype(jnp.float32).reshape(R, CP)
    return point_link_loss_call(pred, tgt, masks)


# ---------------------------------------------------------------------------
# PointLinkTrainer.forward equivalent
# ---------------------------------------------------------------------------
def point_link_trainer_forward(imgs, out_four, bboxes, labels):
    _, _, H, W = imgs.shape
    gt = gt_convert_np(np.asarray(bboxes), np.asarray(labels), W)
    tgt, masks = build_packed_targets(gt)
    vals = _loss_jit(out_four, jnp.asarray(tgt), jnp.asarray(masks))
    return {name: vals[i] for i, name in enumerate(LOSS_NAMES)}


# ---------------------------------------------------------------------------
# Literal nested-loop numpy reference of compute_loss (for verification)
# ---------------------------------------------------------------------------
def compute_loss_ref(out_four, gt):
    gt_ps, gt_ps_d, gt_cs, gt_cs_d, gt_labels, gt_lcx, gt_lcy, gt_lpx, gt_lpy = gt
    out_four = np.asarray(out_four, np.float64)
    mse = lambda a, b: float(np.sum((np.asarray(a, np.float64) - np.asarray(b, np.float64)) ** 2))
    loss1 = loss2 = loss3 = loss4 = 0.0
    loss_nopt = 0.0
    ce = cp = cn = co = 0.0
    gt_cs_list = gt_cs.tolist()
    for d in range(4):
        out = out_four[d]
        ps_list = gt_ps[:, d].tolist()
        for ix in range(GRID):
            for iy in range(GRID):
                for j in range(2 * B):
                    if j < B:
                        if [ix, iy] in ps_list:
                            w = np.where(gt_ps[:, d] == [ix, iy])[0][0]
                            loss1 += (out[ix, iy, j, 0] - 1) ** 2
                            loss2 += W_CLASS * mse(out[ix, iy, j, 1:1 + CLASSES], gt_labels[w])
                            loss3 += W_COORD * mse(out[ix, iy, j, 1 + CLASSES:3 + CLASSES], gt_ps_d[w, d])
                            loss4 += (W_LINK * mse(out[ix, iy, j, 3 + CLASSES:3 + CLASSES + GRID], gt_lcx[w])
                                      + mse(out[ix, iy, j, 3 + CLASSES + GRID:3 + CLASSES + 2 * GRID], gt_lcy[w]))
                        else:
                            loss_nopt += out[ix, iy, j, 0] ** 2
                    if j >= B:
                        if [ix, iy] in gt_cs_list:
                            w = np.where(gt_cs == [ix, iy])[0][0]
                            loss1 += (out[ix, iy, j, 0] - 1) ** 2
                            ce += (out[ix, iy, 2, 0] - 1) ** 2
                            cp += (out[ix, iy, 2, 0] - 1) ** 2
                            loss2 += W_CLASS * mse(out[ix, iy, j, 1:1 + CLASSES], gt_labels[w])
                            co += W_COORD * mse(out[ix, iy, 2, 1 + CLASSES:3 + CLASSES], gt_cs_d[w])
                            ce += W_COORD * mse(out[ix, iy, 2, 1 + CLASSES:3 + CLASSES], gt_cs_d[w])
                            loss3 += W_COORD * mse(out[ix, iy, j, 1 + CLASSES:3 + CLASSES], gt_cs_d[w])
                            loss4 += (W_LINK * mse(out[ix, iy, j, 3 + CLASSES:3 + CLASSES + GRID], gt_lpx[w, d])
                                      + mse(out[ix, iy, j, 3 + CLASSES + GRID:3 + CLASSES + 2 * GRID], gt_lcy[w]))
                        else:
                            loss_nopt += out[ix, iy, 2, 0] ** 2
                            cn += out[ix, iy, 2, 0] ** 2
                            ce += W_NOPT * out[ix, iy, 2, 0] ** 2
    loss_pt = loss1 + loss2 + loss3 + loss4
    total = W_PT * loss_pt + W_NOPT * loss_nopt
    return np.array([loss1, loss2, loss3, loss4, loss_pt, loss_nopt,
                     loss1 + W_NOPT * loss_nopt, ce, cp, cn, co, total])


if __name__ == "__main__":
    key = jax.random.PRNGKey(0)
    k1, k2 = jax.random.split(key)
    imgs = jax.random.normal(k1, (1, 3, 448, 448), dtype=jnp.float32)            # NCHW
    out_four = jax.random.uniform(k2, (4, GRID, GRID, NPRED, C), dtype=jnp.float32)
    bboxes = jnp.array([[[50.0, 60.0, 200.0, 220.0],
                         [300.0, 100.0, 400.0, 380.0]]], dtype=jnp.float32)
    labels = jnp.array([[3, 7]], dtype=jnp.int32)

    losses = point_link_trainer_forward(imgs, out_four, bboxes, labels)
    losses = {k: jax.block_until_ready(v) for k, v in losses.items()}

    gt = gt_convert_np(np.asarray(bboxes), np.asarray(labels), imgs.shape[3])
    ref = compute_loss_ref(np.asarray(out_four), gt)
    got = np.array([float(losses[n]) for n in LOSS_NAMES])
    np.testing.assert_allclose(got, ref, rtol=2e-3, atol=2e-3)
    print("KERNEL_OK")
</pallas_src>

<mosaic_0001>
module attributes {stable_mosaic.version = 11 : i64} {
  func.func @_loss_kernel(%arg0: memref<784x204xf32, #tpu.memory_space<vmem>>, %arg1: memref<784x204xf32, #tpu.memory_space<vmem>>, %arg2: memref<4x784xf32, #tpu.memory_space<vmem>>, %arg3: memref<12xf32, #tpu.memory_space<smem>>, %arg4: memref<784x204xf32, #tpu.memory_space<vmem>>, %arg5: memref<4x204xf32, #tpu.memory_space<vmem>>) attributes {dimension_semantics = [], scalar_prefetch = 0 : i64, scratch_operands = 2 : i64, tpu.core_type = #tpu.core_type<tc>} {
    %c0 = arith.constant 0 : index
    %c0_0 = arith.constant 0 : index
    %0 = vector.load %arg0[%c0, %c0_0] : memref<784x204xf32, #tpu.memory_space<vmem>>, vector<784x204xf32>
    %c0_1 = arith.constant 0 : index
    %c0_2 = arith.constant 0 : index
    %1 = vector.load %arg1[%c0_1, %c0_2] : memref<784x204xf32, #tpu.memory_space<vmem>>, vector<784x204xf32>
    %2 = arith.subf %0, %1 : vector<784x204xf32>
    %3 = arith.mulf %2, %2 : vector<784x204xf32>
    %c0_3 = arith.constant 0 : index
    %c0_4 = arith.constant 0 : index
    %4 = vector.load %arg4[%c0_3, %c0_4] : memref<784x204xf32, #tpu.memory_space<vmem>>, vector<784x204xf32>
    tpu.vector_store %arg4[%c0_3, %c0_4], %3 {strides = array<i32>} : memref<784x204xf32, #tpu.memory_space<vmem>>, vector<784x204xf32>,
    %c0_5 = arith.constant 0 : index
    %c0_6 = arith.constant 0 : index
    %5 = vector.load %arg2[%c0_5, %c0_6] : memref<4x784xf32, #tpu.memory_space<vmem>>, vector<4x784xf32>
    %c0_7 = arith.constant 0 : index
    %c0_8 = arith.constant 0 : index
    %6 = vector.load %arg4[%c0_7, %c0_8] : memref<784x204xf32, #tpu.memory_space<vmem>>, vector<784x204xf32>
    %cst = arith.constant dense<0.000000e+00> : vector<4x204xf32>
    %7 = tpu.matmul %5, %6, %cst {dimension_numbers = #tpu.dot_dimension_numbers<[1], [0], [0], [1], [0, 0, 1, 1], [], []>} : vector<4x784xf32>, vector<784x204xf32>, vector<4x204xf32> -> vector<4x204xf32>
    %c0_9 = arith.constant 0 : index
    %c0_10 = arith.constant 0 : index
    %8 = vector.load %arg5[%c0_9, %c0_10] : memref<4x204xf32, #tpu.memory_space<vmem>>, vector<4x204xf32>
    tpu.vector_store %arg5[%c0_9, %c0_10], %7 {strides = array<i32>} : memref<4x204xf32, #tpu.memory_space<vmem>>, vector<4x204xf32>,
    %c0_11 = arith.constant 0 : index
    %c0_12 = arith.constant 0 : index
    %9 = vector.load %arg5[%c0_11, %c0_12] : memref<4x204xf32, #tpu.memory_space<vmem>>, vector<1x1xf32>
    %10 = vector.shape_cast %9 : vector<1x1xf32> to vector<1x1x1xf32>
    %cst_13 = arith.constant dense<0.000000e+00> : vector<1xf32>
    %11 = vector.multi_reduction <add>, %10, %cst_13 [1, 2] : vector<1x1x1xf32> to vector<1xf32>
    %12 = vector.shape_cast %11 : vector<1xf32> to vector<1x1x1xf32>
    %13 = vector.extract %12[0, 0, 0] : f32 from vector<1x1x1xf32>
    %c0_14 = arith.constant 0 : index
    %c1 = arith.constant 1 : index
    %14 = vector.load %arg5[%c0_14, %c1] : memref<4x204xf32, #tpu.memory_space<vmem>>, vector<1x20xf32>
    %15 = vector.shape_cast %14 : vector<1x20xf32> to vector<1x1x20xf32>
    %cst_15 = arith.constant dense<0.000000e+00> : vector<1xf32>
    %16 = vector.multi_reduction <add>, %15, %cst_15 [1, 2] : vector<1x1x20xf32> to vector<1xf32>
    %17 = vector.shape_cast %16 : vector<1xf32> to vector<1x1x1xf32>
    %18 = vector.extract %17[0, 0, 0] : f32 from vector<1x1x1xf32>
    %c0_16 = arith.constant 0 : index
    %c21 = arith.constant 21 : index
    %19 = vector.load %arg5[%c0_16, %c21] : memref<4x204xf32, #tpu.memory_space<vmem>>, vector<1x2xf32>
    %20 = vector.shape_cast %19 : vector<1x2xf32> to vector<1x1x2xf32>
    %cst_17 = arith.constant dense<0.000000e+00> : vector<1xf32>
    %21 = vector.multi_reduction <add>, %20, %cst_17 [1, 2] : vector<1x1x2xf32> to vector<1xf32>
    %22 = vector.shape_cast %21 : vector<1xf32> to vector<1x1x1xf32>
    %23 = vector.extract %22[0, 0, 0] : f32 from vector<1x1x1xf32>
    %c0_18 = arith.constant 0 : index
    %c23 = arith.constant 23 : index
    %24 = vector.load %arg5[%c0_18, %c23] : memref<4x204xf32, #tpu.memory_space<vmem>>, vector<1x14xf32>
    %25 = vector.shape_cast %24 : vector<1x14xf32> to vector<1x1x14xf32>
    %cst_19 = arith.constant dense<0.000000e+00> : vector<1xf32>
    %26 = vector.multi_reduction <add>, %25, %cst_19 [1, 2] : vector<1x1x14xf32> to vector<1xf32>
    %27 = vector.shape_cast %26 : vector<1xf32> to vector<1x1x1xf32>
    %28 = vector.extract %27[0, 0, 0] : f32 from vector<1x1x1xf32>
    %c0_20 = arith.constant 0 : index
    %c37 = arith.constant 37 : index
    %29 = vector.load %arg5[%c0_20, %c37] : memref<4x204xf32, #tpu.memory_space<vmem>>, vector<1x14xf32>
    %30 = vector.shape_cast %29 : vector<1x14xf32> to vector<1x1x14xf32>
    %cst_21 = arith.constant dense<0.000000e+00> : vector<1xf32>
    %31 = vector.multi_reduction <add>, %30, %cst_21 [1, 2] : vector<1x1x14xf32> to vector<1xf32>
    %32 = vector.shape_cast %31 : vector<1xf32> to vector<1x1x1xf32>
    %33 = vector.extract %32[0, 0, 0] : f32 from vector<1x1x1xf32>
    %c0_22 = arith.constant 0 : index
    %c51 = arith.constant 51 : index
    %34 = vector.load %arg5[%c0_22, %c51] : memref<4x204xf32, #tpu.memory_space<vmem>>, vector<1x1xf32>
    %35 = vector.shape_cast %34 : vector<1x1xf32> to vector<1x1x1xf32>
    %cst_23 = arith.constant dense<0.000000e+00> : vector<1xf32>
    %36 = vector.multi_reduction <add>, %35, %cst_23 [1, 2] : vector<1x1x1xf32> to vector<1xf32>
    %37 = vector.shape_cast %36 : vector<1xf32> to vector<1x1x1xf32>
    %38 = vector.extract %37[0, 0, 0] : f32 from vector<1x1x1xf32>
    %c0_24 = arith.constant 0 : index
    %c52 = arith.constant 52 : index
    %39 = vector.load %arg5[%c0_24, %c52] : memref<4x204xf32, #tpu.memory_space<vmem>>, vector<1x20xf32>
    %40 = vector.shape_cast %39 : vector<1x20xf32> to vector<1x1x20xf32>
    %cst_25 = arith.constant dense<0.000000e+00> : vector<1xf32>
    %41 = vector.multi_reduction <add>, %40, %cst_25 [1, 2] : vector<1x1x20xf32> to vector<1xf32>
    %42 = vector.shape_cast %41 : vector<1xf32> to vector<1x1x1xf32>
    %43 = vector.extract %42[0, 0, 0] : f32 from vector<1x1x1xf32>
    %c0_26 = arith.constant 0 : index
    %c72 = arith.constant 72 : index
    %44 = vector.load %arg5[%c0_26, %c72] : memref<4x204xf32, #tpu.memory_space<vmem>>, vector<1x2xf32>
    %45 = vector.shape_cast %44 : vector<1x2xf32> to vector<1x1x2xf32>
    %cst_27 = arith.constant dense<0.000000e+00> : vector<1xf32>
    %46 = vector.multi_reduction <add>, %45, %cst_27 [1, 2] : vector<1x1x2xf32> to vector<1xf32>
    %47 = vector.shape_cast %46 : vector<1xf32> to vector<1x1x1xf32>
    %48 = vector.extract %47[0, 0, 0] : f32 from vector<1x1x1xf32>
    %c0_28 = arith.constant 0 : index
    %c74 = arith.constant 74 : index
    %49 = vector.load %arg5[%c0_28, %c74] : memref<4x204xf32, #tpu.memory_space<vmem>>, vector<1x14xf32>
    %50 = vector.shape_cast %49 : vector<1x14xf32> to vector<1x1x14xf32>
    %cst_29 = arith.constant dense<0.000000e+00> : vector<1xf32>
    %51 = vector.multi_reduction <add>, %50, %cst_29 [1, 2] : vector<1x1x14xf32> to vector<1xf32>
    %52 = vector.shape_cast %51 : vector<1xf32> to vector<1x1x1xf32>
    %53 = vector.extract %52[0, 0, 0] : f32 from vector<1x1x1xf32>
    %c0_30 = arith.constant 0 : index
    %c88 = arith.constant 88 : index
    %54 = vector.load %arg5[%c0_30, %c88] : memref<4x204xf32, #tpu.memory_space<vmem>>, vector<1x14xf32>
    %55 = vector.shape_cast %54 : vector<1x14xf32> to vector<1x1x14xf32>
    %cst_31 = arith.constant dense<0.000000e+00> : vector<1xf32>
    %56 = vector.multi_reduction <add>, %55, %cst_31 [1, 2] : vector<1x1x14xf32> to vector<1xf32>
    %57 = vector.shape_cast %56 : vector<1xf32> to vector<1x1x1xf32>
    %58 = vector.extract %57[0, 0, 0] : f32 from vector<1x1x1xf32>
    %c1_32 = arith.constant 1 : index
    %c102 = arith.constant 102 : index
    %59 = vector.load %arg5[%c1_32, %c102] : memref<4x204xf32, #tpu.memory_space<vmem>>, vector<1x1xf32>
    %60 = vector.shape_cast %59 : vector<1x1xf32> to vector<1x1x1xf32>
    %cst_33 = arith.constant dense<0.000000e+00> : vector<1xf32>
    %61 = vector.multi_reduction <add>, %60, %cst_33 [1, 2] : vector<1x1x1xf32> to vector<1xf32>
    %62 = vector.shape_cast %61 : vector<1xf32> to vector<1x1x1xf32>
    %63 = vector.extract %62[0, 0, 0] : f32 from vector<1x1x1xf32>
    %c1_34 = arith.constant 1 : index
    %c103 = arith.constant 103 : index
    %64 = vector.load %arg5[%c1_34, %c103] : memref<4x204xf32, #tpu.memory_space<vmem>>, vector<1x20xf32>
    %65 = vector.shape_cast %64 : vector<1x20xf32> to vector<1x1x20xf32>
    %cst_35 = arith.constant dense<0.000000e+00> : vector<1xf32>
    %66 = vector.multi_reduction <add>, %65, %cst_35 [1, 2] : vector<1x1x20xf32> to vector<1xf32>
    %67 = vector.shape_cast %66 : vector<1xf32> to vector<1x1x1xf32>
    %68 = vector.extract %67[0, 0, 0] : f32 from vector<1x1x1xf32>
    %c1_36 = arith.constant 1 : index
    %c123 = arith.constant 123 : index
    %69 = vector.load %arg5[%c1_36, %c123] : memref<4x204xf32, #tpu.memory_space<vmem>>, vector<1x2xf32>
    %70 = vector.shape_cast %69 : vector<1x2xf32> to vector<1x1x2xf32>
    %cst_37 = arith.constant dense<0.000000e+00> : vector<1xf32>
    %71 = vector.multi_reduction <add>, %70, %cst_37 [1, 2] : vector<1x1x2xf32> to vector<1xf32>
    %72 = vector.shape_cast %71 : vector<1xf32> to vector<1x1x1xf32>
    %73 = vector.extract %72[0, 0, 0] : f32 from vector<1x1x1xf32>
    %c1_38 = arith.constant 1 : index
    %c125 = arith.constant 125 : index
    %74 = vector.load %arg5[%c1_38, %c125] : memref<4x204xf32, #tpu.memory_space<vmem>>, vector<1x14xf32>
    %75 = vector.shape_cast %74 : vector<1x14xf32> to vector<1x1x14xf32>
    %cst_39 = arith.constant dense<0.000000e+00> : vector<1xf32>
    %76 = vector.multi_reduction <add>, %75, %cst_39 [1, 2] : vector<1x1x14xf32> to vector<1xf32>
    %77 = vector.shape_cast %76 : vector<1xf32> to vector<1x1x1xf32>
    %78 = vector.extract %77[0, 0, 0] : f32 from vector<1x1x1xf32>
    %c1_40 = arith.constant 1 : index
    %c139 = arith.constant 139 : index
    %79 = vector.load %arg5[%c1_40, %c139] : memref<4x204xf32, #tpu.memory_space<vmem>>, vector<1x14xf32>
    %80 = vector.shape_cast %79 : vector<1x14xf32> to vector<1x1x14xf32>
    %cst_41 = arith.constant dense<0.000000e+00> : vector<1xf32>
    %81 = vector.multi_reduction <add>, %80, %cst_41 [1, 2] : vector<1x1x14xf32> to vector<1xf32>
    %82 = vector.shape_cast %81 : vector<1xf32> to vector<1x1x1xf32>
    %83 = vector.extract %82[0, 0, 0] : f32 from vector<1x1x1xf32>
    %c1_42 = arith.constant 1 : index
    %c153 = arith.constant 153 : index
    %84 = vector.load %arg5[%c1_42, %c153] : memref<4x204xf32, #tpu.memory_space<vmem>>, vector<1x1xf32>
    %85 = vector.shape_cast %84 : vector<1x1xf32> to vector<1x1x1xf32>
    %cst_43 = arith.constant dense<0.000000e+00> : vector<1xf32>
    %86 = vector.multi_reduction <add>, %85, %cst_43 [1, 2] : vector<1x1x1xf32> to vector<1xf32>
    %87 = vector.shape_cast %86 : vector<1xf32> to vector<1x1x1xf32>
    %88 = vector.extract %87[0, 0, 0] : f32 from vector<1x1x1xf32>
    %c1_44 = arith.constant 1 : index
    %c154 = arith.constant 154 : index
    %89 = vector.load %arg5[%c1_44, %c154] : memref<4x204xf32, #tpu.memory_space<vmem>>, vector<1x20xf32>
    %90 = vector.shape_cast %89 : vector<1x20xf32> to vector<1x1x20xf32>
    %cst_45 = arith.constant dense<0.000000e+00> : vector<1xf32>
    %91 = vector.multi_reduction <add>, %90, %cst_45 [1, 2] : vector<1x1x20xf32> to vector<1xf32>
    %92 = vector.shape_cast %91 : vector<1xf32> to vector<1x1x1xf32>
    %93 = vector.extract %92[0, 0, 0] : f32 from vector<1x1x1xf32>
    %c1_46 = arith.constant 1 : index
    %c174 = arith.constant 174 : index
    %94 = vector.load %arg5[%c1_46, %c174] : memref<4x204xf32, #tpu.memory_space<vmem>>, vector<1x2xf32>
    %95 = vector.shape_cast %94 : vector<1x2xf32> to vector<1x1x2xf32>
    %cst_47 = arith.constant dense<0.000000e+00> : vector<1xf32>
    %96 = vector.multi_reduction <add>, %95, %cst_47 [1, 2] : vector<1x1x2xf32> to vector<1xf32>
    %97 = vector.shape_cast %96 : vector<1xf32> to vector<1x1x1xf32>
    %98 = vector.extract %97[0, 0, 0] : f32 from vector<1x1x1xf32>
    %c1_48 = arith.constant 1 : index
    %c176 = arith.constant 176 : index
    %99 = vector.load %arg5[%c1_48, %c176] : memref<4x204xf32, #tpu.memory_space<vmem>>, vector<1x14xf32>
    %100 = vector.shape_cast %99 : vector<1x14xf32> to vector<1x1x14xf32>
    %cst_49 = arith.constant dense<0.000000e+00> : vector<1xf32>
    %101 = vector.multi_reduction <add>, %100, %cst_49 [1, 2] : vector<1x1x14xf32> to vector<1xf32>
    %102 = vector.shape_cast %101 : vector<1xf32> to vector<1x1x1xf32>
    %103 = vector.extract %102[0, 0, 0] : f32 from vector<1x1x1xf32>
    %c1_50 = arith.constant 1 : index
    %c190 = arith.constant 190 : index
    %104 = vector.load %arg5[%c1_50, %c190] : memref<4x204xf32, #tpu.memory_space<vmem>>, vector<1x14xf32>
    %105 = vector.shape_cast %104 : vector<1x14xf32> to vector<1x1x14xf32>
    %cst_51 = arith.constant dense<0.000000e+00> : vector<1xf32>
    %106 = vector.multi_reduction <add>, %105, %cst_51 [1, 2] : vector<1x1x14xf32> to vector<1xf32>
    %107 = vector.shape_cast %106 : vector<1xf32> to vector<1x1x1xf32>
    %108 = vector.extract %107[0, 0, 0] : f32 from vector<1x1x1xf32>
    %c2 = arith.constant 2 : index
    %c0_52 = arith.constant 0 : index
    %109 = vector.load %arg5[%c2, %c0_52] : memref<4x204xf32, #tpu.memory_space<vmem>>, vector<1x1xf32>
    %110 = vector.shape_cast %109 : vector<1x1xf32> to vector<1x1x1xf32>
    %cst_53 = arith.constant dense<0.000000e+00> : vector<1xf32>
    %111 = vector.multi_reduction <add>, %110, %cst_53 [1, 2] : vector<1x1x1xf32> to vector<1xf32>
    %112 = vector.shape_cast %111 : vector<1xf32> to vector<1x1x1xf32>
    %113 = vector.extract %112[0, 0, 0] : f32 from vector<1x1x1xf32>
    %c2_54 = arith.constant 2 : index
    %c51_55 = arith.constant 51 : index
    %114 = vector.load %arg5[%c2_54, %c51_55] : memref<4x204xf32, #tpu.memory_space<vmem>>, vector<1x1xf32>
    %115 = vector.shape_cast %114 : vector<1x1xf32> to vector<1x1x1xf32>
    %cst_56 = arith.constant dense<0.000000e+00> : vector<1xf32>
    %116 = vector.multi_reduction <add>, %115, %cst_56 [1, 2] : vector<1x1x1xf32> to vector<1xf32>
    %117 = vector.shape_cast %116 : vector<1xf32> to vector<1x1x1xf32>
    %118 = vector.extract %117[0, 0, 0] : f32 from vector<1x1x1xf32>
    %119 = arith.addf %113, %118 : f32
    %c3 = arith.constant 3 : index
    %c102_57 = arith.constant 102 : index
    %120 = vector.load %arg5[%c3, %c102_57] : memref<4x204xf32, #tpu.memory_space<vmem>>, vector<1x1xf32>
    %121 = vector.shape_cast %120 : vector<1x1xf32> to vector<1x1x1xf32>
    %cst_58 = arith.constant dense<0.000000e+00> : vector<1xf32>
    %122 = vector.multi_reduction <add>, %121, %cst_58 [1, 2] : vector<1x1x1xf32> to vector<1xf32>
    %123 = vector.shape_cast %122 : vector<1xf32> to vector<1x1x1xf32>
    %124 = vector.extract %123[0, 0, 0] : f32 from vector<1x1x1xf32>
    %125 = arith.addf %13, %38 : f32
    %126 = arith.addf %125, %63 : f32
    %127 = arith.addf %126, %88 : f32
    %128 = arith.addf %18, %43 : f32
    %129 = arith.addf %128, %68 : f32
    %130 = arith.addf %129, %93 : f32
    %cst_59 = arith.constant 1.000000e+00 : f32
    %131 = arith.mulf %cst_59, %130 : f32
    %132 = arith.addf %23, %48 : f32
    %133 = arith.addf %132, %73 : f32
    %134 = arith.addf %133, %98 : f32
    %cst_60 = arith.constant 5.000000e+00 : f32
    %135 = arith.mulf %cst_60, %134 : f32
    %136 = arith.addf %28, %53 : f32
    %137 = arith.addf %136, %78 : f32
    %138 = arith.addf %137, %103 : f32
    %cst_61 = arith.constant 1.000000e+00 : f32
    %139 = arith.mulf %cst_61, %138 : f32
    %140 = arith.addf %33, %58 : f32
    %141 = arith.addf %140, %83 : f32
    %142 = arith.addf %141, %108 : f32
    %143 = arith.addf %139, %142 : f32
    %144 = arith.addf %127, %131 : f32
    %145 = arith.addf %144, %135 : f32
    %146 = arith.addf %145, %143 : f32
    %cst_62 = arith.constant 2.000000e+00 : f32
    %147 = arith.mulf %cst_62, %124 : f32
    %148 = arith.addf %119, %147 : f32
    %cst_63 = arith.constant 1.000000e+00 : f32
    %149 = arith.mulf %cst_63, %146 : f32
    %cst_64 = arith.constant 5.000000e-02 : f32
    %150 = arith.mulf %cst_64, %148 : f32
    %151 = arith.addf %149, %150 : f32
    %cst_65 = arith.constant 5.000000e+00 : f32
    %152 = arith.mulf %cst_65, %73 : f32
    %153 = arith.addf %63, %152 : f32
    %cst_66 = arith.constant 2.000000e+00 : f32
    %154 = arith.mulf %cst_66, %153 : f32
    %cst_67 = arith.constant 1.000000e-01 : f32
    %155 = arith.mulf %cst_67, %124 : f32
    %156 = arith.addf %154, %155 : f32
    %cst_68 = arith.constant 2.000000e+00 : f32
    %157 = arith.mulf %cst_68, %63 : f32
    %cst_69 = arith.constant 2.000000e+00 : f32
    %158 = arith.mulf %cst_69, %124 : f32
    %cst_70 = arith.constant 1.000000e+01 : f32
    %159 = arith.mulf %cst_70, %73 : f32
    %cst_71 = arith.constant 5.000000e-02 : f32
    %160 = arith.mulf %cst_71, %148 : f32
    %161 = arith.addf %127, %160 : f32
    %c0_72 = arith.constant 0 : index
    %162 = memref.load %arg3[%c0_72] : memref<12xf32, #tpu.memory_space<smem>>
    memref.store %127, %arg3[%c0_72] : memref<12xf32, #tpu.memory_space<smem>>
    %c1_73 = arith.constant 1 : index
    %163 = memref.load %arg3[%c1_73] : memref<12xf32, #tpu.memory_space<smem>>
    memref.store %131, %arg3[%c1_73] : memref<12xf32, #tpu.memory_space<smem>>
    %c2_74 = arith.constant 2 : index
    %164 = memref.load %arg3[%c2_74] : memref<12xf32, #tpu.memory_space<smem>>
    memref.store %135, %arg3[%c2_74] : memref<12xf32, #tpu.memory_space<smem>>
    %c3_75 = arith.constant 3 : index
    %165 = memref.load %arg3[%c3_75] : memref<12xf32, #tpu.memory_space<smem>>
    memref.store %143, %arg3[%c3_75] : memref<12xf32, #tpu.memory_space<smem>>
    %c4 = arith.constant 4 : index
    %166 = memref.load %arg3[%c4] : memref<12xf32, #tpu.memory_space<smem>>
    memref.store %146, %arg3[%c4] : memref<12xf32, #tpu.memory_space<smem>>
    %c5 = arith.constant 5 : index
    %167 = memref.load %arg3[%c5] : memref<12xf32, #tpu.memory_space<smem>>
    memref.store %148, %arg3[%c5] : memref<12xf32, #tpu.memory_space<smem>>
    %c6 = arith.constant 6 : index
    %168 = memref.load %arg3[%c6] : memref<12xf32, #tpu.memory_space<smem>>
    memref.store %161, %arg3[%c6] : memref<12xf32, #tpu.memory_space<smem>>
    %c7 = arith.constant 7 : index
    %169 = memref.load %arg3[%c7] : memref<12xf32, #tpu.memory_space<smem>>
    memref.store %156, %arg3[%c7] : memref<12xf32, #tpu.memory_space<smem>>
    %c8 = arith.constant 8 : index
    %170 = memref.load %arg3[%c8] : memref<12xf32, #tpu.memory_space<smem>>
    memref.store %157, %arg3[%c8] : memref<12xf32, #tpu.memory_space<smem>>
    %c9 = arith.constant 9 : index
    %171 = memref.load %arg3[%c9] : memref<12xf32, #tpu.memory_space<smem>>
    memref.store %158, %arg3[%c9] : memref<12xf32, #tpu.memory_space<smem>>
    %c10 = arith.constant 10 : index
    %172 = memref.load %arg3[%c10] : memref<12xf32, #tpu.memory_space<smem>>
    memref.store %159, %arg3[%c10] : memref<12xf32, #tpu.memory_space<smem>>
    %c11 = arith.constant 11 : index
    %173 = memref.load %arg3[%c11] : memref<12xf32, #tpu.memory_space<smem>>
    memref.store %151, %arg3[%c11] : memref<12xf32, #tpu.memory_space<smem>>
    return
  }
}

</mosaic_0001>

<llo_original>
// kernel: _loss_jit.1
$region0: #{_loss_jit.1}
  #allocation0 [shape = 'u32[]', space=smem, size = 0x4, offset = 0x4, fixed_abs, tag = 'smem constant byte address 0x4 - core index']
  #allocation1 [shape = 'u32[72,128]{1,0:T(1,128)}', space=vmem, size = 0x9000, scoped, tag = 'internal scratch']
  #allocation2 [shape = 'f32[784,204]{1,0:T(8,128)}', space=vmem, size = 0xc4000, scoped, tag = 'scratch operand']
  #allocation3 [shape = 'f32[4,204]{1,0:T(4,128)}', space=vmem, size = 0x1000, scoped, tag = 'scratch operand']
  %s0 = inlined_call_operand.vmem [shape: f32[784,204], index: 0, kind: input, shape index: {}]
  %s1 = inlined_call_operand.vmem [shape: f32[784,204], index: 1, kind: input, shape index: {}]
  %s2 = inlined_call_operand.vmem [shape: f32[4,784], index: 2, kind: input, shape index: {}]
  %s3 = inlined_call_operand.hbm [shape: f32[12], index: 3, kind: output, shape index: {}]
  %s4 = sld [smem:[#allocation0]]
  $region22: #{_loss_jit.1} parent=0
    _
  %s6 = ssub.s32 1, %s4
  %s7 = scalar_select 0, %s6, %s4
  $region1: #{_loss_jit.1} parent=0
    #allocation4 [shape = 'u8[512]{0}', space=smem, size = 0x200, scoped, tag = 'output window, operand 0, single buffered']
    #allocation5 [shape = 's32[1]{0}', space=sflag, size = 0x4, scoped, tag = 'scoped memory for _loss_jit.1']
    %8 = vsyncpa [#allocation5], 0
    // Predicated region
    $region2: #{_loss_jit.1} parent=1 // pred_check
      _
    $region3: #{_loss_jit.1} parent=1 // pred_check_branch
      %10 = sbr.rel (0) target = $region5
    $region4: #{_loss_jit.1} parent=1 // pred_region
      _
    $region5: #{_loss_jit.1} parent=1 // pred_fallthru
      _
    // Predicated region
    $region6: #{_loss_jit.1} parent=1 // pred_check
      _
    $region7: #{_loss_jit.1} parent=1 // pred_check_branch
      %12 = sbr.rel (0) target = $region9
    $region8: #{_loss_jit.1} parent=1 // pred_region
      _
    $region9: #{_loss_jit.1} parent=1 // pred_fallthru
      _
    // Predicated region
    $region10: #{_loss_jit.1} parent=1 // pred_check
      _
    $region11: #{_loss_jit.1} parent=1 // pred_check_branch
      %14 = sbr.rel (0) target = $region13
    $region12: #{_loss_jit.1} parent=1 // pred_region
      _
    $region13: #{_loss_jit.1} parent=1 // pred_fallthru
      _
    %v15 = vld [vmem:[%s0] sm:$0xff]
    %v16 = vld [vmem:[%s0 + $0x8] sm:$0xff]
    %v17 = vld [vmem:[%s0 + $0x10] sm:$0xff]
    %v18 = vld [vmem:[%s0 + $0x18] sm:$0xff]
    %v19 = vld [vmem:[%s0 + $0x20] sm:$0xff]
    %v20 = vld [vmem:[%s0 + $0x28] sm:$0xff]
    %v21 = vld [vmem:[%s0 + $0x30] sm:$0xff]
    %v22 = vld [vmem:[%s0 + $0x38] sm:$0xff]
    %v23 = vld [vmem:[%s0 + $0x40] sm:$0xff]
    %v24 = vld [vmem:[%s0 + $0x48] sm:$0xff]
    %v25 = vld [vmem:[%s0 + $0x50] sm:$0xff]
    %v26 = vld [vmem:[%s0 + $0x58] sm:$0xff]
    %v27 = vld [vmem:[%s0 + $0x60] sm:$0xff]
    %v28 = vld [vmem:[%s0 + $0x68] sm:$0xff]
    %v29 = vld [vmem:[%s0 + $0x70] sm:$0xff]
    %v30 = vld [vmem:[%s0 + $0x78] sm:$0xff]
    %v31 = vld [vmem:[%s0 + $0x80] sm:$0xff]
    %v32 = vld [vmem:[%s0 + $0x88] sm:$0xff]
    %v33 = vld [vmem:[%s0 + $0x90] sm:$0xff]
    %v34 = vld [vmem:[%s0 + $0x98] sm:$0xff]
    %v35 = vld [vmem:[%s0 + $0xa0] sm:$0xff]
    %v36 = vld [vmem:[%s0 + $0xa8] sm:$0xff]
    %v37 = vld [vmem:[%s0 + $0xb0] sm:$0xff]
    %v38 = vld [vmem:[%s0 + $0xb8] sm:$0xff]
    %v39 = vld [vmem:[%s0 + $0xc0] sm:$0xff]
    %v40 = vld [vmem:[%s0 + $0xc8] sm:$0xff]
    %v41 = vld [vmem:[%s0 + $0xd0] sm:$0xff]
    %v42 = vld [vmem:[%s0 + $0xd8] sm:$0xff]
    %v43 = vld [vmem:[%s0 + $0xe0] sm:$0xff]
    %v44 = vld [vmem:[%s0 + $0xe8] sm:$0xff]
    %v45 = vld [vmem:[%s0 + $0xf0] sm:$0xff]
    %v46 = vld [vmem:[%s0 + $0xf8] sm:$0xff]
    %v47 = vld [vmem:[%s0 + $0x100] sm:$0xff]
    %v48 = vld [vmem:[%s0 + $0x108] sm:$0xff]
    %v49 = vld [vmem:[%s0 + $0x110] sm:$0xff]
    %v50 = vld [vmem:[%s0 + $0x118] sm:$0xff]
    %v51 = vld [vmem:[%s0 + $0x120] sm:$0xff]
    %v52 = vld [vmem:[%s0 + $0x128] sm:$0xff]
    %v53 = vld [vmem:[%s0 + $0x130] sm:$0xff]
    %v54 = vld [vmem:[%s0 + $0x138] sm:$0xff]
    %v55 = vld [vmem:[%s0 + $0x140] sm:$0xff]
    %v56 = vld [vmem:[%s0 + $0x148] sm:$0xff]
    %v57 = vld [vmem:[%s0 + $0x150] sm:$0xff]
    %v58 = vld [vmem:[%s0 + $0x158] sm:$0xff]
    %v59 = vld [vmem:[%s0 + $0x160] sm:$0xff]
    %v60 = vld [vmem:[%s0 + $0x168] sm:$0xff]
    %v61 = vld [vmem:[%s0 + $0x170] sm:$0xff]
    %v62 = vld [vmem:[%s0 + $0x178] sm:$0xff]
    %v63 = vld [vmem:[%s0 + $0x180] sm:$0xff]
    %v64 = vld [vmem:[%s0 + $0x188] sm:$0xff]
    %v65 = vld [vmem:[%s0 + $0x190] sm:$0xff]
    %v66 = vld [vmem:[%s0 + $0x198] sm:$0xff]
    %v67 = vld [vmem:[%s0 + $0x1a0] sm:$0xff]
    %v68 = vld [vmem:[%s0 + $0x1a8] sm:$0xff]
    %v69 = vld [vmem:[%s0 + $0x1b0] sm:$0xff]
    %v70 = vld [vmem:[%s0 + $0x1b8] sm:$0xff]
    %v71 = vld [vmem:[%s0 + $0x1c0] sm:$0xff]
    %v72 = vld [vmem:[%s0 + $0x1c8] sm:$0xff]
    %v73 = vld [vmem:[%s0 + $0x1d0] sm:$0xff]
    %v74 = vld [vmem:[%s0 + $0x1d8] sm:$0xff]
    %v75 = vld [vmem:[%s0 + $0x1e0] sm:$0xff]
    %v76 = vld [vmem:[%s0 + $0x1e8] sm:$0xff]
    %v77 = vld [vmem:[%s0 + $0x1f0] sm:$0xff]
    %v78 = vld [vmem:[%s0 + $0x1f8] sm:$0xff]
    %v79 = vld [vmem:[%s0 + $0x200] sm:$0xff]
    %v80 = vld [vmem:[%s0 + $0x208] sm:$0xff]
    %v81 = vld [vmem:[%s0 + $0x210] sm:$0xff]
    %v82 = vld [vmem:[%s0 + $0x218] sm:$0xff]
    %v83 = vld [vmem:[%s0 + $0x220] sm:$0xff]
    %v84 = vld [vmem:[%s0 + $0x228] sm:$0xff]
    %v85 = vld [vmem:[%s0 + $0x230] sm:$0xff]
    %v86 = vld [vmem:[%s0 + $0x238] sm:$0xff]
    %v87 = vld [vmem:[%s0 + $0x240] sm:$0xff]
    %v88 = vld [vmem:[%s0 + $0x248] sm:$0xff]
    %v89 = vld [vmem:[%s0 + $0x250] sm:$0xff]
    %v90 = vld [vmem:[%s0 + $0x258] sm:$0xff]
    %v91 = vld [vmem:[%s0 + $0x260] sm:$0xff]
    %v92 = vld [vmem:[%s0 + $0x268] sm:$0xff]
    %v93 = vld [vmem:[%s0 + $0x270] sm:$0xff]
    %v94 = vld [vmem:[%s0 + $0x278] sm:$0xff]
    %v95 = vld [vmem:[%s0 + $0x280] sm:$0xff]
    %v96 = vld [vmem:[%s0 + $0x288] sm:$0xff]
    %v97 = vld [vmem:[%s0 + $0x290] sm:$0xff]
    %v98 = vld [vmem:[%s0 + $0x298] sm:$0xff]
    %v99 = vld [vmem:[%s0 + $0x2a0] sm:$0xff]
    %v100 = vld [vmem:[%s0 + $0x2a8] sm:$0xff]
    %v101 = vld [vmem:[%s0 + $0x2b0] sm:$0xff]
    %v102 = vld [vmem:[%s0 + $0x2b8] sm:$0xff]
    %v103 = vld [vmem:[%s0 + $0x2c0] sm:$0xff]
    %v104 = vld [vmem:[%s0 + $0x2c8] sm:$0xff]
    %v105 = vld [vmem:[%s0 + $0x2d0] sm:$0xff]
    %v106 = vld [vmem:[%s0 + $0x2d8] sm:$0xff]
    %v107 = vld [vmem:[%s0 + $0x2e0] sm:$0xff]
    %v108 = vld [vmem:[%s0 + $0x2e8] sm:$0xff]
    %v109 = vld [vmem:[%s0 + $0x2f0] sm:$0xff]
    %v110 = vld [vmem:[%s0 + $0x2f8] sm:$0xff]
    %v111 = vld [vmem:[%s0 + $0x300] sm:$0xff]
    %v112 = vld [vmem:[%s0 + $0x308] sm:$0xff]
    %v113 = vld [vmem:[%s0 + $0x310] sm:$0xff]
    %v114 = vld [vmem:[%s0 + $0x318] sm:$0xff]
    %v115 = vld [vmem:[%s0 + $0x320] sm:$0xff]
    %v116 = vld [vmem:[%s0 + $0x328] sm:$0xff]
    %v117 = vld [vmem:[%s0 + $0x330] sm:$0xff]
    %v118 = vld [vmem:[%s0 + $0x338] sm:$0xff]
    %v119 = vld [vmem:[%s0 + $0x340] sm:$0xff]
    %v120 = vld [vmem:[%s0 + $0x348] sm:$0xff]
    %v121 = vld [vmem:[%s0 + $0x350] sm:$0xff]
    %v122 = vld [vmem:[%s0 + $0x358] sm:$0xff]
    %v123 = vld [vmem:[%s0 + $0x360] sm:$0xff]
    %v124 = vld [vmem:[%s0 + $0x368] sm:$0xff]
    %v125 = vld [vmem:[%s0 + $0x370] sm:$0xff]
    %v126 = vld [vmem:[%s0 + $0x378] sm:$0xff]
    %v127 = vld [vmem:[%s0 + $0x380] sm:$0xff]
    %v128 = vld [vmem:[%s0 + $0x388] sm:$0xff]
    %v129 = vld [vmem:[%s0 + $0x390] sm:$0xff]
    %v130 = vld [vmem:[%s0 + $0x398] sm:$0xff]
    %v131 = vld [vmem:[%s0 + $0x3a0] sm:$0xff]
    %v132 = vld [vmem:[%s0 + $0x3a8] sm:$0xff]
    %v133 = vld [vmem:[%s0 + $0x3b0] sm:$0xff]
    %v134 = vld [vmem:[%s0 + $0x3b8] sm:$0xff]
    %v135 = vld [vmem:[%s0 + $0x3c0] sm:$0xff]
    %v136 = vld [vmem:[%s0 + $0x3c8] sm:$0xff]
    %v137 = vld [vmem:[%s0 + $0x3d0] sm:$0xff]
    %v138 = vld [vmem:[%s0 + $0x3d8] sm:$0xff]
    %v139 = vld [vmem:[%s0 + $0x3e0] sm:$0xff]
    %v140 = vld [vmem:[%s0 + $0x3e8] sm:$0xff]
    %v141 = vld [vmem:[%s0 + $0x3f0] sm:$0xff]
    %v142 = vld [vmem:[%s0 + $0x3f8] sm:$0xff]
    %v143 = vld [vmem:[%s0 + $0x400] sm:$0xff]
    %v144 = vld [vmem:[%s0 + $0x408] sm:$0xff]
    %v145 = vld [vmem:[%s0 + $0x410] sm:$0xff]
    %v146 = vld [vmem:[%s0 + $0x418] sm:$0xff]
    %v147 = vld [vmem:[%s0 + $0x420] sm:$0xff]
    %v148 = vld [vmem:[%s0 + $0x428] sm:$0xff]
    %v149 = vld [vmem:[%s0 + $0x430] sm:$0xff]
    %v150 = vld [vmem:[%s0 + $0x438] sm:$0xff]
    %v151 = vld [vmem:[%s0 + $0x440] sm:$0xff]
    %v152 = vld [vmem:[%s0 + $0x448] sm:$0xff]
    %v153 = vld [vmem:[%s0 + $0x450] sm:$0xff]
    %v154 = vld [vmem:[%s0 + $0x458] sm:$0xff]
    %v155 = vld [vmem:[%s0 + $0x460] sm:$0xff]
    %v156 = vld [vmem:[%s0 + $0x468] sm:$0xff]
    %v157 = vld [vmem:[%s0 + $0x470] sm:$0xff]
    %v158 = vld [vmem:[%s0 + $0x478] sm:$0xff]
    %v159 = vld [vmem:[%s0 + $0x480] sm:$0xff]
    %v160 = vld [vmem:[%s0 + $0x488] sm:$0xff]
    %v161 = vld [vmem:[%s0 + $0x490] sm:$0xff]
    %v162 = vld [vmem:[%s0 + $0x498] sm:$0xff]
    %v163 = vld [vmem:[%s0 + $0x4a0] sm:$0xff]
    %v164 = vld [vmem:[%s0 + $0x4a8] sm:$0xff]
    %v165 = vld [vmem:[%s0 + $0x4b0] sm:$0xff]
    %v166 = vld [vmem:[%s0 + $0x4b8] sm:$0xff]
    %v167 = vld [vmem:[%s0 + $0x4c0] sm:$0xff]
    %v168 = vld [vmem:[%s0 + $0x4c8] sm:$0xff]
    %v169 = vld [vmem:[%s0 + $0x4d0] sm:$0xff]
    %v170 = vld [vmem:[%s0 + $0x4d8] sm:$0xff]
    %v171 = vld [vmem:[%s0 + $0x4e0] sm:$0xff]
    %v172 = vld [vmem:[%s0 + $0x4e8] sm:$0xff]
    %v173 = vld [vmem:[%s0 + $0x4f0] sm:$0xff]
    %v174 = vld [vmem:[%s0 + $0x4f8] sm:$0xff]
    %v175 = vld [vmem:[%s0 + $0x500] sm:$0xff]
    %v176 = vld [vmem:[%s0 + $0x508] sm:$0xff]
    %v177 = vld [vmem:[%s0 + $0x510] sm:$0xff]
    %v178 = vld [vmem:[%s0 + $0x518] sm:$0xff]
    %v179 = vld [vmem:[%s0 + $0x520] sm:$0xff]
    %v180 = vld [vmem:[%s0 + $0x528] sm:$0xff]
    %v181 = vld [vmem:[%s0 + $0x530] sm:$0xff]
    %v182 = vld [vmem:[%s0 + $0x538] sm:$0xff]
    %v183 = vld [vmem:[%s0 + $0x540] sm:$0xff]
    %v184 = vld [vmem:[%s0 + $0x548] sm:$0xff]
    %v185 = vld [vmem:[%s0 + $0x550] sm:$0xff]
    %v186 = vld [vmem:[%s0 + $0x558] sm:$0xff]
    %v187 = vld [vmem:[%s0 + $0x560] sm:$0xff]
    %v188 = vld [vmem:[%s0 + $0x568] sm:$0xff]
    %v189 = vld [vmem:[%s0 + $0x570] sm:$0xff]
    %v190 = vld [vmem:[%s0 + $0x578] sm:$0xff]
    %v191 = vld [vmem:[%s0 + $0x580] sm:$0xff]
    %v192 = vld [vmem:[%s0 + $0x588] sm:$0xff]
    %v193 = vld [vmem:[%s0 + $0x590] sm:$0xff]
    %v194 = vld [vmem:[%s0 + $0x598] sm:$0xff]
    %v195 = vld [vmem:[%s0 + $0x5a0] sm:$0xff]
    %v196 = vld [vmem:[%s0 + $0x5a8] sm:$0xff]
    %v197 = vld [vmem:[%s0 + $0x5b0] sm:$0xff]
    %v198 = vld [vmem:[%s0 + $0x5b8] sm:$0xff]
    %v199 = vld [vmem:[%s0 + $0x5c0] sm:$0xff]
    %v200 = vld [vmem:[%s0 + $0x5c8] sm:$0xff]
    %v201 = vld [vmem:[%s0 + $0x5d0] sm:$0xff]
    %v202 = vld [vmem:[%s0 + $0x5d8] sm:$0xff]
    %v203 = vld [vmem:[%s0 + $0x5e0] sm:$0xff]
    %v204 = vld [vmem:[%s0 + $0x5e8] sm:$0xff]
    %v205 = vld [vmem:[%s0 + $0x5f0] sm:$0xff]
    %v206 = vld [vmem:[%s0 + $0x5f8] sm:$0xff]
    %v207 = vld [vmem:[%s0 + $0x600] sm:$0xff]
    %v208 = vld [vmem:[%s0 + $0x608] sm:$0xff]
    %v209 = vld [vmem:[%s0 + $0x610] sm:$0xff]
    %v210 = vld [vmem:[%s0 + $0x618] sm:$0xff]
    %v211 = vld [vmem:[%s1] sm:$0xff]
    %v212 = vld [vmem:[%s1 + $0x8] sm:$0xff]
    %v213 = vld [vmem:[%s1 + $0x10] sm:$0xff]
    %v214 = vld [vmem:[%s1 + $0x18] sm:$0xff]
    %v215 = vld [vmem:[%s1 + $0x20] sm:$0xff]
    %v216 = vld [vmem:[%s1 + $0x28] sm:$0xff]
    %v217 = vld [vmem:[%s1 + $0x30] sm:$0xff]
    %v218 = vld [vmem:[%s1 + $0x38] sm:$0xff]
    %v219 = vld [vmem:[%s1 + $0x40] sm:$0xff]
    %v220 = vld [vmem:[%s1 + $0x48] sm:$0xff]
    %v221 = vld [vmem:[%s1 + $0x50] sm:$0xff]
    %v222 = vld [vmem:[%s1 + $0x58] sm:$0xff]
    %v223 = vld [vmem:[%s1 + $0x60] sm:$0xff]
    %v224 = vld [vmem:[%s1 + $0x68] sm:$0xff]
    %v225 = vld [vmem:[%s1 + $0x70] sm:$0xff]
    %v226 = vld [vmem:[%s1 + $0x78] sm:$0xff]
    %v227 = vld [vmem:[%s1 + $0x80] sm:$0xff]
    %v228 = vld [vmem:[%s1 + $0x88] sm:$0xff]
    %v229 = vld [vmem:[%s1 + $0x90] sm:$0xff]
    %v230 = vld [vmem:[%s1 + $0x98] sm:$0xff]
    %v231 = vld [vmem:[%s1 + $0xa0] sm:$0xff]
    %v232 = vld [vmem:[%s1 + $0xa8] sm:$0xff]
    %v233 = vld [vmem:[%s1 + $0xb0] sm:$0xff]
    %v234 = vld [vmem:[%s1 + $0xb8] sm:$0xff]
    %v235 = vld [vmem:[%s1 + $0xc0] sm:$0xff]
    %v236 = vld [vmem:[%s1 + $0xc8] sm:$0xff]
    %v237 = vld [vmem:[%s1 + $0xd0] sm:$0xff]
    %v238 = vld [vmem:[%s1 + $0xd8] sm:$0xff]
    %v239 = vld [vmem:[%s1 + $0xe0] sm:$0xff]
    %v240 = vld [vmem:[%s1 + $0xe8] sm:$0xff]
    %v241 = vld [vmem:[%s1 + $0xf0] sm:$0xff]
    %v242 = vld [vmem:[%s1 + $0xf8] sm:$0xff]
    %v243 = vld [vmem:[%s1 + $0x100] sm:$0xff]
    %v244 = vld [vmem:[%s1 + $0x108] sm:$0xff]
    %v245 = vld [vmem:[%s1 + $0x110] sm:$0xff]
    %v246 = vld [vmem:[%s1 + $0x118] sm:$0xff]
    %v247 = vld [vmem:[%s1 + $0x120] sm:$0xff]
    %v248 = vld [vmem:[%s1 + $0x128] sm:$0xff]
    %v249 = vld [vmem:[%s1 + $0x130] sm:$0xff]
    %v250 = vld [vmem:[%s1 + $0x138] sm:$0xff]
    %v251 = vld [vmem:[%s1 + $0x140] sm:$0xff]
    %v252 = vld [vmem:[%s1 + $0x148] sm:$0xff]
    %v253 = vld [vmem:[%s1 + $0x150] sm:$0xff]
    %v254 = vld [vmem:[%s1 + $0x158] sm:$0xff]
    %v255 = vld [vmem:[%s1 + $0x160] sm:$0xff]
    %v256 = vld [vmem:[%s1 + $0x168] sm:$0xff]
    %v257 = vld [vmem:[%s1 + $0x170] sm:$0xff]
    %v258 = vld [vmem:[%s1 + $0x178] sm:$0xff]
    %v259 = vld [vmem:[%s1 + $0x180] sm:$0xff]
    %v260 = vld [vmem:[%s1 + $0x188] sm:$0xff]
    %v261 = vld [vmem:[%s1 + $0x190] sm:$0xff]
    %v262 = vld [vmem:[%s1 + $0x198] sm:$0xff]
    %v263 = vld [vmem:[%s1 + $0x1a0] sm:$0xff]
    %v264 = vld [vmem:[%s1 + $0x1a8] sm:$0xff]
    %v265 = vld [vmem:[%s1 + $0x1b0] sm:$0xff]
    %v266 = vld [vmem:[%s1 + $0x1b8] sm:$0xff]
    %v267 = vld [vmem:[%s1 + $0x1c0] sm:$0xff]
    %v268 = vld [vmem:[%s1 + $0x1c8] sm:$0xff]
    %v269 = vld [vmem:[%s1 + $0x1d0] sm:$0xff]
    %v270 = vld [vmem:[%s1 + $0x1d8] sm:$0xff]
    %v271 = vld [vmem:[%s1 + $0x1e0] sm:$0xff]
    %v272 = vld [vmem:[%s1 + $0x1e8] sm:$0xff]
    %v273 = vld [vmem:[%s1 + $0x1f0] sm:$0xff]
    %v274 = vld [vmem:[%s1 + $0x1f8] sm:$0xff]
    %v275 = vld [vmem:[%s1 + $0x200] sm:$0xff]
    %v276 = vld [vmem:[%s1 + $0x208] sm:$0xff]
    %v277 = vld [vmem:[%s1 + $0x210] sm:$0xff]
    %v278 = vld [vmem:[%s1 + $0x218] sm:$0xff]
    %v279 = vld [vmem:[%s1 + $0x220] sm:$0xff]
    %v280 = vld [vmem:[%s1 + $0x228] sm:$0xff]
    %v281 = vld [vmem:[%s1 + $0x230] sm:$0xff]
    %v282 = vld [vmem:[%s1 + $0x238] sm:$0xff]
    %v283 = vld [vmem:[%s1 + $0x240] sm:$0xff]
    %v284 = vld [vmem:[%s1 + $0x248] sm:$0xff]
    %v285 = vld [vmem:[%s1 + $0x250] sm:$0xff]
    %v286 = vld [vmem:[%s1 + $0x258] sm:$0xff]
    %v287 = vld [vmem:[%s1 + $0x260] sm:$0xff]
    %v288 = vld [vmem:[%s1 + $0x268] sm:$0xff]
    %v289 = vld [vmem:[%s1 + $0x270] sm:$0xff]
    %v290 = vld [vmem:[%s1 + $0x278] sm:$0xff]
    %v291 = vld [vmem:[%s1 + $0x280] sm:$0xff]
    %v292 = vld [vmem:[%s1 + $0x288] sm:$0xff]
    %v293 = vld [vmem:[%s1 + $0x290] sm:$0xff]
    %v294 = vld [vmem:[%s1 + $0x298] sm:$0xff]
    %v295 = vld [vmem:[%s1 + $0x2a0] sm:$0xff]
    %v296 = vld [vmem:[%s1 + $0x2a8] sm:$0xff]
    %v297 = vld [vmem:[%s1 + $0x2b0] sm:$0xff]
    %v298 = vld [vmem:[%s1 + $0x2b8] sm:$0xff]
    %v299 = vld [vmem:[%s1 + $0x2c0] sm:$0xff]
    %v300 = vld [vmem:[%s1 + $0x2c8] sm:$0xff]
    %v301 = vld [vmem:[%s1 + $0x2d0] sm:$0xff]
    %v302 = vld [vmem:[%s1 + $0x2d8] sm:$0xff]
    %v303 = vld [vmem:[%s1 + $0x2e0] sm:$0xff]
    %v304 = vld [vmem:[%s1 + $0x2e8] sm:$0xff]
    %v305 = vld [vmem:[%s1 + $0x2f0] sm:$0xff]
    %v306 = vld [vmem:[%s1 + $0x2f8] sm:$0xff]
    %v307 = vld [vmem:[%s1 + $0x300] sm:$0xff]
    %v308 = vld [vmem:[%s1 + $0x308] sm:$0xff]
    %v309 = vld [vmem:[%s1 + $0x310] sm:$0xff]
    %v310 = vld [vmem:[%s1 + $0x318] sm:$0xff]
    %v311 = vld [vmem:[%s1 + $0x320] sm:$0xff]
    %v312 = vld [vmem:[%s1 + $0x328] sm:$0xff]
    %v313 = vld [vmem:[%s1 + $0x330] sm:$0xff]
    %v314 = vld [vmem:[%s1 + $0x338] sm:$0xff]
    %v315 = vld [vmem:[%s1 + $0x340] sm:$0xff]
    %v316 = vld [vmem:[%s1 + $0x348] sm:$0xff]
    %v317 = vld [vmem:[%s1 + $0x350] sm:$0xff]
    %v318 = vld [vmem:[%s1 + $0x358] sm:$0xff]
    %v319 = vld [vmem:[%s1 + $0x360] sm:$0xff]
    %v320 = vld [vmem:[%s1 + $0x368] sm:$0xff]
    %v321 = vld [vmem:[%s1 + $0x370] sm:$0xff]
    %v322 = vld [vmem:[%s1 + $0x378] sm:$0xff]
    %v323 = vld [vmem:[%s1 + $0x380] sm:$0xff]
    %v324 = vld [vmem:[%s1 + $0x388] sm:$0xff]
    %v325 = vld [vmem:[%s1 + $0x390] sm:$0xff]
    %v326 = vld [vmem:[%s1 + $0x398] sm:$0xff]
    %v327 = vld [vmem:[%s1 + $0x3a0] sm:$0xff]
    %v328 = vld [vmem:[%s1 + $0x3a8] sm:$0xff]
    %v329 = vld [vmem:[%s1 + $0x3b0] sm:$0xff]
    %v330 = vld [vmem:[%s1 + $0x3b8] sm:$0xff]
    %v331 = vld [vmem:[%s1 + $0x3c0] sm:$0xff]
    %v332 = vld [vmem:[%s1 + $0x3c8] sm:$0xff]
    %v333 = vld [vmem:[%s1 + $0x3d0] sm:$0xff]
    %v334 = vld [vmem:[%s1 + $0x3d8] sm:$0xff]
    %v335 = vld [vmem:[%s1 + $0x3e0] sm:$0xff]
    %v336 = vld [vmem:[%s1 + $0x3e8] sm:$0xff]
    %v337 = vld [vmem:[%s1 + $0x3f0] sm:$0xff]
    %v338 = vld [vmem:[%s1 + $0x3f8] sm:$0xff]
    %v339 = vld [vmem:[%s1 + $0x400] sm:$0xff]
    %v340 = vld [vmem:[%s1 + $0x408] sm:$0xff]
    %v341 = vld [vmem:[%s1 + $0x410] sm:$0xff]
    %v342 = vld [vmem:[%s1 + $0x418] sm:$0xff]
    %v343 = vld [vmem:[%s1 + $0x420] sm:$0xff]
    %v344 = vld [vmem:[%s1 + $0x428] sm:$0xff]
    %v345 = vld [vmem:[%s1 + $0x430] sm:$0xff]
    %v346 = vld [vmem:[%s1 + $0x438] sm:$0xff]
    %v347 = vld [vmem:[%s1 + $0x440] sm:$0xff]
    %v348 = vld [vmem:[%s1 + $0x448] sm:$0xff]
    %v349 = vld [vmem:[%s1 + $0x450] sm:$0xff]
    %v350 = vld [vmem:[%s1 + $0x458] sm:$0xff]
    %v351 = vld [vmem:[%s1 + $0x460] sm:$0xff]
    %v352 = vld [vmem:[%s1 + $0x468] sm:$0xff]
    %v353 = vld [vmem:[%s1 + $0x470] sm:$0xff]
    %v354 = vld [vmem:[%s1 + $0x478] sm:$0xff]
    %v355 = vld [vmem:[%s1 + $0x480] sm:$0xff]
    %v356 = vld [vmem:[%s1 + $0x488] sm:$0xff]
    %v357 = vld [vmem:[%s1 + $0x490] sm:$0xff]
    %v358 = vld [vmem:[%s1 + $0x498] sm:$0xff]
    %v359 = vld [vmem:[%s1 + $0x4a0] sm:$0xff]
    %v360 = vld [vmem:[%s1 + $0x4a8] sm:$0xff]
    %v361 = vld [vmem:[%s1 + $0x4b0] sm:$0xff]
    %v362 = vld [vmem:[%s1 + $0x4b8] sm:$0xff]
    %v363 = vld [vmem:[%s1 + $0x4c0] sm:$0xff]
    %v364 = vld [vmem:[%s1 + $0x4c8] sm:$0xff]
    %v365 = vld [vmem:[%s1 + $0x4d0] sm:$0xff]
    %v366 = vld [vmem:[%s1 + $0x4d8] sm:$0xff]
    %v367 = vld [vmem:[%s1 + $0x4e0] sm:$0xff]
    %v368 = vld [vmem:[%s1 + $0x4e8] sm:$0xff]
    %v369 = vld [vmem:[%s1 + $0x4f0] sm:$0xff]
    %v370 = vld [vmem:[%s1 + $0x4f8] sm:$0xff]
    %v371 = vld [vmem:[%s1 + $0x500] sm:$0xff]
    %v372 = vld [vmem:[%s1 + $0x508] sm:$0xff]
    %v373 = vld [vmem:[%s1 + $0x510] sm:$0xff]
    %v374 = vld [vmem:[%s1 + $0x518] sm:$0xff]
    %v375 = vld [vmem:[%s1 + $0x520] sm:$0xff]
    %v376 = vld [vmem:[%s1 + $0x528] sm:$0xff]
    %v377 = vld [vmem:[%s1 + $0x530] sm:$0xff]
    %v378 = vld [vmem:[%s1 + $0x538] sm:$0xff]
    %v379 = vld [vmem:[%s1 + $0x540] sm:$0xff]
    %v380 = vld [vmem:[%s1 + $0x548] sm:$0xff]
    %v381 = vld [vmem:[%s1 + $0x550] sm:$0xff]
    %v382 = vld [vmem:[%s1 + $0x558] sm:$0xff]
    %v383 = vld [vmem:[%s1 + $0x560] sm:$0xff]
    %v384 = vld [vmem:[%s1 + $0x568] sm:$0xff]
    %v385 = vld [vmem:[%s1 + $0x570] sm:$0xff]
    %v386 = vld [vmem:[%s1 + $0x578] sm:$0xff]
    %v387 = vld [vmem:[%s1 + $0x580] sm:$0xff]
    %v388 = vld [vmem:[%s1 + $0x588] sm:$0xff]
    %v389 = vld [vmem:[%s1 + $0x590] sm:$0xff]
    %v390 = vld [vmem:[%s1 + $0x598] sm:$0xff]
    %v391 = vld [vmem:[%s1 + $0x5a0] sm:$0xff]
    %v392 = vld [vmem:[%s1 + $0x5a8] sm:$0xff]
    %v393 = vld [vmem:[%s1 + $0x5b0] sm:$0xff]
    %v394 = vld [vmem:[%s1 + $0x5b8] sm:$0xff]
    %v395 = vld [vmem:[%s1 + $0x5c0] sm:$0xff]
    %v396 = vld [vmem:[%s1 + $0x5c8] sm:$0xff]
    %v397 = vld [vmem:[%s1 + $0x5d0] sm:$0xff]
    %v398 = vld [vmem:[%s1 + $0x5d8] sm:$0xff]
    %v399 = vld [vmem:[%s1 + $0x5e0] sm:$0xff]
    %v400 = vld [vmem:[%s1 + $0x5e8] sm:$0xff]
    %v401 = vld [vmem:[%s1 + $0x5f0] sm:$0xff]
    %v402 = vld [vmem:[%s1 + $0x5f8] sm:$0xff]
    %v403 = vld [vmem:[%s1 + $0x600] sm:$0xff]
    %v404 = vld [vmem:[%s1 + $0x608] sm:$0xff]
    %v405 = vld [vmem:[%s1 + $0x610] sm:$0xff]
    %v406 = vld [vmem:[%s1 + $0x618] sm:$0xff]
    %v407 = vsub.f32 %v15, %v211
    %v408 = vsub.f32 %v16, %v212
    %v409 = vsub.f32 %v17, %v213
    %v410 = vsub.f32 %v18, %v214
    %v411 = vsub.f32 %v19, %v215
    %v412 = vsub.f32 %v20, %v216
    %v413 = vsub.f32 %v21, %v217
    %v414 = vsub.f32 %v22, %v218
    %v415 = vsub.f32 %v23, %v219
    %v416 = vsub.f32 %v24, %v220
    %v417 = vsub.f32 %v25, %v221
    %v418 = vsub.f32 %v26, %v222
    %v419 = vsub.f32 %v27, %v223
    %v420 = vsub.f32 %v28, %v224
    %v421 = vsub.f32 %v29, %v225
    %v422 = vsub.f32 %v30, %v226
    %v423 = vsub.f32 %v31, %v227
    %v424 = vsub.f32 %v32, %v228
    %v425 = vsub.f32 %v33, %v229
    %v426 = vsub.f32 %v34, %v230
    %v427 = vsub.f32 %v35, %v231
    %v428 = vsub.f32 %v36, %v232
    %v429 = vsub.f32 %v37, %v233
    %v430 = vsub.f32 %v38, %v234
    %v431 = vsub.f32 %v39, %v235
    %v432 = vsub.f32 %v40, %v236
    %v433 = vsub.f32 %v41, %v237
    %v434 = vsub.f32 %v42, %v238
    %v435 = vsub.f32 %v43, %v239
    %v436 = vsub.f32 %v44, %v240
    %v437 = vsub.f32 %v45, %v241
    %v438 = vsub.f32 %v46, %v242
    %v439 = vsub.f32 %v47, %v243
    %v440 = vsub.f32 %v48, %v244
    %v441 = vsub.f32 %v49, %v245
    %v442 = vsub.f32 %v50, %v246
    %v443 = vsub.f32 %v51, %v247
    %v444 = vsub.f32 %v52, %v248
    %v445 = vsub.f32 %v53, %v249
    %v446 = vsub.f32 %v54, %v250
    %v447 = vsub.f32 %v55, %v251
    %v448 = vsub.f32 %v56, %v252
    %v449 = vsub.f32 %v57, %v253
    %v450 = vsub.f32 %v58, %v254
    %v451 = vsub.f32 %v59, %v255
    %v452 = vsub.f32 %v60, %v256
    %v453 = vsub.f32 %v61, %v257
    %v454 = vsub.f32 %v62, %v258
    %v455 = vsub.f32 %v63, %v259
    %v456 = vsub.f32 %v64, %v260
    %v457 = vsub.f32 %v65, %v261
    %v458 = vsub.f32 %v66, %v262
    %v459 = vsub.f32 %v67, %v263
    %v460 = vsub.f32 %v68, %v264
    %v461 = vsub.f32 %v69, %v265
    %v462 = vsub.f32 %v70, %v266
    %v463 = vsub.f32 %v71, %v267
    %v464 = vsub.f32 %v72, %v268
    %v465 = vsub.f32 %v73, %v269
    %v466 = vsub.f32 %v74, %v270
    %v467 = vsub.f32 %v75, %v271
    %v468 = vsub.f32 %v76, %v272
    %v469 = vsub.f32 %v77, %v273
    %v470 = vsub.f32 %v78, %v274
    %v471 = vsub.f32 %v79, %v275
    %v472 = vsub.f32 %v80, %v276
    %v473 = vsub.f32 %v81, %v277
    %v474 = vsub.f32 %v82, %v278
    %v475 = vsub.f32 %v83, %v279
    %v476 = vsub.f32 %v84, %v280
    %v477 = vsub.f32 %v85, %v281
    %v478 = vsub.f32 %v86, %v282
    %v479 = vsub.f32 %v87, %v283
    %v480 = vsub.f32 %v88, %v284
    %v481 = vsub.f32 %v89, %v285
    %v482 = vsub.f32 %v90, %v286
    %v483 = vsub.f32 %v91, %v287
    %v484 = vsub.f32 %v92, %v288
    %v485 = vsub.f32 %v93, %v289
    %v486 = vsub.f32 %v94, %v290
    %v487 = vsub.f32 %v95, %v291
    %v488 = vsub.f32 %v96, %v292
    %v489 = vsub.f32 %v97, %v293
    %v490 = vsub.f32 %v98, %v294
    %v491 = vsub.f32 %v99, %v295
    %v492 = vsub.f32 %v100, %v296
    %v493 = vsub.f32 %v101, %v297
    %v494 = vsub.f32 %v102, %v298
    %v495 = vsub.f32 %v103, %v299
    %v496 = vsub.f32 %v104, %v300
    %v497 = vsub.f32 %v105, %v301
    %v498 = vsub.f32 %v106, %v302
    %v499 = vsub.f32 %v107, %v303
    %v500 = vsub.f32 %v108, %v304
    %v501 = vsub.f32 %v109, %v305
    %v502 = vsub.f32 %v110, %v306
    %v503 = vsub.f32 %v111, %v307
    %v504 = vsub.f32 %v112, %v308
    %v505 = vsub.f32 %v113, %v309
    %v506 = vsub.f32 %v114, %v310
    %v507 = vsub.f32 %v115, %v311
    %v508 = vsub.f32 %v116, %v312
    %v509 = vsub.f32 %v117, %v313
    %v510 = vsub.f32 %v118, %v314
    %v511 = vsub.f32 %v119, %v315
    %v512 = vsub.f32 %v120, %v316
    %v513 = vsub.f32 %v121, %v317
    %v514 = vsub.f32 %v122, %v318
    %v515 = vsub.f32 %v123, %v319
    %v516 = vsub.f32 %v124, %v320
    %v517 = vsub.f32 %v125, %v321
    %v518 = vsub.f32 %v126, %v322
    %v519 = vsub.f32 %v127, %v323
    %v520 = vsub.f32 %v128, %v324
    %v521 = vsub.f32 %v129, %v325
    %v522 = vsub.f32 %v130, %v326
    %v523 = vsub.f32 %v131, %v327
    %v524 = vsub.f32 %v132, %v328
    %v525 = vsub.f32 %v133, %v329
    %v526 = vsub.f32 %v134, %v330
    %v527 = vsub.f32 %v135, %v331
    %v528 = vsub.f32 %v136, %v332
    %v529 = vsub.f32 %v137, %v333
    %v530 = vsub.f32 %v138, %v334
    %v531 = vsub.f32 %v139, %v335
    %v532 = vsub.f32 %v140, %v336
    %v533 = vsub.f32 %v141, %v337
    %v534 = vsub.f32 %v142, %v338
    %v535 = vsub.f32 %v143, %v339
    %v536 = vsub.f32 %v144, %v340
    %v537 = vsub.f32 %v145, %v341
    %v538 = vsub.f32 %v146, %v342
    %v539 = vsub.f32 %v147, %v343
    %v540 = vsub.f32 %v148, %v344
    %v541 = vsub.f32 %v149, %v345
    %v542 = vsub.f32 %v150, %v346
    %v543 = vsub.f32 %v151, %v347
    %v544 = vsub.f32 %v152, %v348
    %v545 = vsub.f32 %v153, %v349
    %v546 = vsub.f32 %v154, %v350
    %v547 = vsub.f32 %v155, %v351
    %v548 = vsub.f32 %v156, %v352
    %v549 = vsub.f32 %v157, %v353
    %v550 = vsub.f32 %v158, %v354
    %v551 = vsub.f32 %v159, %v355
    %v552 = vsub.f32 %v160, %v356
    %v553 = vsub.f32 %v161, %v357
    %v554 = vsub.f32 %v162, %v358
    %v555 = vsub.f32 %v163, %v359
    %v556 = vsub.f32 %v164, %v360
    %v557 = vsub.f32 %v165, %v361
    %v558 = vsub.f32 %v166, %v362
    %v559 = vsub.f32 %v167, %v363
    %v560 = vsub.f32 %v168, %v364
    %v561 = vsub.f32 %v169, %v365
    %v562 = vsub.f32 %v170, %v366
    %v563 = vsub.f32 %v171, %v367
    %v564 = vsub.f32 %v172, %v368
    %v565 = vsub.f32 %v173, %v369
    %v566 = vsub.f32 %v174, %v370
    %v567 = vsub.f32 %v175, %v371
    %v568 = vsub.f32 %v176, %v372
    %v569 = vsub.f32 %v177, %v373
    %v570 = vsub.f32 %v178, %v374
    %v571 = vsub.f32 %v179, %v375
    %v572 = vsub.f32 %v180, %v376
    %v573 = vsub.f32 %v181, %v377
    %v574 = vsub.f32 %v182, %v378
    %v575 = vsub.f32 %v183, %v379
    %v576 = vsub.f32 %v184, %v380
    %v577 = vsub.f32 %v185, %v381
    %v578 = vsub.f32 %v186, %v382
    %v579 = vsub.f32 %v187, %v383
    %v580 = vsub.f32 %v188, %v384
    %v581 = vsub.f32 %v189, %v385
    %v582 = vsub.f32 %v190, %v386
    %v583 = vsub.f32 %v191, %v387
    %v584 = vsub.f32 %v192, %v388
    %v585 = vsub.f32 %v193, %v389
    %v586 = vsub.f32 %v194, %v390
    %v587 = vsub.f32 %v195, %v391
    %v588 = vsub.f32 %v196, %v392
    %v589 = vsub.f32 %v197, %v393
    %v590 = vsub.f32 %v198, %v394
    %v591 = vsub.f32 %v199, %v395
    %v592 = vsub.f32 %v200, %v396
    %v593 = vsub.f32 %v201, %v397
    %v594 = vsub.f32 %v202, %v398
    %v595 = vsub.f32 %v203, %v399
    %v596 = vsub.f32 %v204, %v400
    %v597 = vsub.f32 %v205, %v401
    %v598 = vsub.f32 %v206, %v402
    %v599 = vsub.f32 %v207, %v403
    %v600 = vsub.f32 %v208, %v404
    %v601 = vsub.f32 %v209, %v405
    %v602 = vsub.f32 %v210, %v406
    %v603 = vmul.f32 %v407, %v407
    %v604 = vmul.f32 %v408, %v408
    %v605 = vmul.f32 %v409, %v409
    %v606 = vmul.f32 %v410, %v410
    %v607 = vmul.f32 %v411, %v411
    %v608 = vmul.f32 %v412, %v412
    %v609 = vmul.f32 %v413, %v413
    %v610 = vmul.f32 %v414, %v414
    %v611 = vmul.f32 %v415, %v415
    %v612 = vmul.f32 %v416, %v416
    %v613 = vmul.f32 %v417, %v417
    %v614 = vmul.f32 %v418, %v418
    %v615 = vmul.f32 %v419, %v419
    %v616 = vmul.f32 %v420, %v420
    %v617 = vmul.f32 %v421, %v421
    %v618 = vmul.f32 %v422, %v422
    %v619 = vmul.f32 %v423, %v423
    %v620 = vmul.f32 %v424, %v424
    %v621 = vmul.f32 %v425, %v425
    %v622 = vmul.f32 %v426, %v426
    %v623 = vmul.f32 %v427, %v427
    %v624 = vmul.f32 %v428, %v428
    %v625 = vmul.f32 %v429, %v429
    %v626 = vmul.f32 %v430, %v430
    %v627 = vmul.f32 %v431, %v431
    %v628 = vmul.f32 %v432, %v432
    %v629 = vmul.f32 %v433, %v433
    %v630 = vmul.f32 %v434, %v434
    %v631 = vmul.f32 %v435, %v435
    %v632 = vmul.f32 %v436, %v436
    %v633 = vmul.f32 %v437, %v437
    %v634 = vmul.f32 %v438, %v438
    %v635 = vmul.f32 %v439, %v439
    %v636 = vmul.f32 %v440, %v440
    %v637 = vmul.f32 %v441, %v441
    %v638 = vmul.f32 %v442, %v442
    %v639 = vmul.f32 %v443, %v443
    %v640 = vmul.f32 %v444, %v444
    %v641 = vmul.f32 %v445, %v445
    %v642 = vmul.f32 %v446, %v446
    %v643 = vmul.f32 %v447, %v447
    %v644 = vmul.f32 %v448, %v448
    %v645 = vmul.f32 %v449, %v449
    %v646 = vmul.f32 %v450, %v450
    %v647 = vmul.f32 %v451, %v451
    %v648 = vmul.f32 %v452, %v452
    %v649 = vmul.f32 %v453, %v453
    %v650 = vmul.f32 %v454, %v454
    %v651 = vmul.f32 %v455, %v455
    %v652 = vmul.f32 %v456, %v456
    %v653 = vmul.f32 %v457, %v457
    %v654 = vmul.f32 %v458, %v458
    %v655 = vmul.f32 %v459, %v459
    %v656 = vmul.f32 %v460, %v460
    %v657 = vmul.f32 %v461, %v461
    %v658 = vmul.f32 %v462, %v462
    %v659 = vmul.f32 %v463, %v463
    %v660 = vmul.f32 %v464, %v464
    %v661 = vmul.f32 %v465, %v465
    %v662 = vmul.f32 %v466, %v466
    %v663 = vmul.f32 %v467, %v467
    %v664 = vmul.f32 %v468, %v468
    %v665 = vmul.f32 %v469, %v469
    %v666 = vmul.f32 %v470, %v470
    %v667 = vmul.f32 %v471, %v471
    %v668 = vmul.f32 %v472, %v472
    %v669 = vmul.f32 %v473, %v473
    %v670 = vmul.f32 %v474, %v474
    %v671 = vmul.f32 %v475, %v475
    %v672 = vmul.f32 %v476, %v476
    %v673 = vmul.f32 %v477, %v477
    %v674 = vmul.f32 %v478, %v478
    %v675 = vmul.f32 %v479, %v479
    %v676 = vmul.f32 %v480, %v480
    %v677 = vmul.f32 %v481, %v481
    %v678 = vmul.f32 %v482, %v482
    %v679 = vmul.f32 %v483, %v483
    %v680 = vmul.f32 %v484, %v484
    %v681 = vmul.f32 %v485, %v485
    %v682 = vmul.f32 %v486, %v486
    %v683 = vmul.f32 %v487, %v487
    %v684 = vmul.f32 %v488, %v488
    %v685 = vmul.f32 %v489, %v489
    %v686 = vmul.f32 %v490, %v490
    %v687 = vmul.f32 %v491, %v491
    %v688 = vmul.f32 %v492, %v492
    %v689 = vmul.f32 %v493, %v493
    %v690 = vmul.f32 %v494, %v494
    %v691 = vmul.f32 %v495, %v495
    %v692 = vmul.f32 %v496, %v496
    %v693 = vmul.f32 %v497, %v497
    %v694 = vmul.f32 %v498, %v498
    %v695 = vmul.f32 %v499, %v499
    %v696 = vmul.f32 %v500, %v500
    %v697 = vmul.f32 %v501, %v501
    %v698 = vmul.f32 %v502, %v502
    %v699 = vmul.f32 %v503, %v503
    %v700 = vmul.f32 %v504, %v504
    %v701 = vmul.f32 %v505, %v505
    %v702 = vmul.f32 %v506, %v506
    %v703 = vmul.f32 %v507, %v507
    %v704 = vmul.f32 %v508, %v508
    %v705 = vmul.f32 %v509, %v509
    %v706 = vmul.f32 %v510, %v510
    %v707 = vmul.f32 %v511, %v511
    %v708 = vmul.f32 %v512, %v512
    %v709 = vmul.f32 %v513, %v513
    %v710 = vmul.f32 %v514, %v514
    %v711 = vmul.f32 %v515, %v515
    %v712 = vmul.f32 %v516, %v516
    %v713 = vmul.f32 %v517, %v517
    %v714 = vmul.f32 %v518, %v518
    %v715 = vmul.f32 %v519, %v519
    %v716 = vmul.f32 %v520, %v520
    %v717 = vmul.f32 %v521, %v521
    %v718 = vmul.f32 %v522, %v522
    %v719 = vmul.f32 %v523, %v523
    %v720 = vmul.f32 %v524, %v524
    %v721 = vmul.f32 %v525, %v525
    %v722 = vmul.f32 %v526, %v526
    %v723 = vmul.f32 %v527, %v527
    %v724 = vmul.f32 %v528, %v528
    %v725 = vmul.f32 %v529, %v529
    %v726 = vmul.f32 %v530, %v530
    %v727 = vmul.f32 %v531, %v531
    %v728 = vmul.f32 %v532, %v532
    %v729 = vmul.f32 %v533, %v533
    %v730 = vmul.f32 %v534, %v534
    %v731 = vmul.f32 %v535, %v535
    %v732 = vmul.f32 %v536, %v536
    %v733 = vmul.f32 %v537, %v537
    %v734 = vmul.f32 %v538, %v538
    %v735 = vmul.f32 %v539, %v539
    %v736 = vmul.f32 %v540, %v540
    %v737 = vmul.f32 %v541, %v541
    %v738 = vmul.f32 %v542, %v542
    %v739 = vmul.f32 %v543, %v543
    %v740 = vmul.f32 %v544, %v544
    %v741 = vmul.f32 %v545, %v545
    %v742 = vmul.f32 %v546, %v546
    %v743 = vmul.f32 %v547, %v547
    %v744 = vmul.f32 %v548, %v548
    %v745 = vmul.f32 %v549, %v549
    %v746 = vmul.f32 %v550, %v550
    %v747 = vmul.f32 %v551, %v551
    %v748 = vmul.f32 %v552, %v552
    %v749 = vmul.f32 %v553, %v553
    %v750 = vmul.f32 %v554, %v554
    %v751 = vmul.f32 %v555, %v555
    %v752 = vmul.f32 %v556, %v556
    %v753 = vmul.f32 %v557, %v557
    %v754 = vmul.f32 %v558, %v558
    %v755 = vmul.f32 %v559, %v559
    %v756 = vmul.f32 %v560, %v560
    %v757 = vmul.f32 %v561, %v561
    %v758 = vmul.f32 %v562, %v562
    %v759 = vmul.f32 %v563, %v563
    %v760 = vmul.f32 %v564, %v564
    %v761 = vmul.f32 %v565, %v565
    %v762 = vmul.f32 %v566, %v566
    %v763 = vmul.f32 %v567, %v567
    %v764 = vmul.f32 %v568, %v568
    %v765 = vmul.f32 %v569, %v569
    %v766 = vmul.f32 %v570, %v570
    %v767 = vmul.f32 %v571, %v571
    %v768 = vmul.f32 %v572, %v572
    %v769 = vmul.f32 %v573, %v573
    %v770 = vmul.f32 %v574, %v574
    %v771 = vmul.f32 %v575, %v575
    %v772 = vmul.f32 %v576, %v576
    %v773 = vmul.f32 %v577, %v577
    %v774 = vmul.f32 %v578, %v578
    %v775 = vmul.f32 %v579, %v579
    %v776 = vmul.f32 %v580, %v580
    %v777 = vmul.f32 %v581, %v581
    %v778 = vmul.f32 %v582, %v582
    %v779 = vmul.f32 %v583, %v583
    %v780 = vmul.f32 %v584, %v584
    %v781 = vmul.f32 %v585, %v585
    %v782 = vmul.f32 %v586, %v586
    %v783 = vmul.f32 %v587, %v587
    %v784 = vmul.f32 %v588, %v588
    %v785 = vmul.f32 %v589, %v589
    %v786 = vmul.f32 %v590, %v590
    %v787 = vmul.f32 %v591, %v591
    %v788 = vmul.f32 %v592, %v592
    %v789 = vmul.f32 %v593, %v593
    %v790 = vmul.f32 %v594, %v594
    %v791 = vmul.f32 %v595, %v595
    %v792 = vmul.f32 %v596, %v596
    %v793 = vmul.f32 %v597, %v597
    %v794 = vmul.f32 %v598, %v598
    %v795 = vmul.f32 %v599, %v599
    %v796 = vmul.f32 %v600, %v600
    %v797 = vmul.f32 %v601, %v601
    %v798 = vmul.f32 %v602, %v602
    %799 = vst [vmem:[#allocation2] sm:$0xff] %v603
    %vm800 = vcmask 621568
    %801 = vst.msk [vmem:[#allocation2 + $0x8] sm:$0xff] %vm800, %v604
    %802 = vst [vmem:[#allocation2 + $0x10] sm:$0xff] %v605
    %803 = vst.msk [vmem:[#allocation2 + $0x18] sm:$0xff] %vm800, %v606
    %804 = vst [vmem:[#allocation2 + $0x20] sm:$0xff] %v607
    %805 = vst.msk [vmem:[#allocation2 + $0x28] sm:$0xff] %vm800, %v608
    %806 = vst [vmem:[#allocation2 + $0x30] sm:$0xff] %v609
    %807 = vst.msk [vmem:[#allocation2 + $0x38] sm:$0xff] %vm800, %v610
    %808 = vst [vmem:[#allocation2 + $0x40] sm:$0xff] %v611
    %809 = vst.msk [vmem:[#allocation2 + $0x48] sm:$0xff] %vm800, %v612
    %810 = vst [vmem:[#allocation2 + $0x50] sm:$0xff] %v613
    %811 = vst.msk [vmem:[#allocation2 + $0x58] sm:$0xff] %vm800, %v614
    %812 = vst [vmem:[#allocation2 + $0x60] sm:$0xff] %v615
    %813 = vst.msk [vmem:[#allocation2 + $0x68] sm:$0xff] %vm800, %v616
    %814 = vst [vmem:[#allocation2 + $0x70] sm:$0xff] %v617
    %815 = vst.msk [vmem:[#allocation2 + $0x78] sm:$0xff] %vm800, %v618
    %816 = vst [vmem:[#allocation2 + $0x80] sm:$0xff] %v619
    %817 = vst.msk [vmem:[#allocation2 + $0x88] sm:$0xff] %vm800, %v620
    %818 = vst [vmem:[#allocation2 + $0x90] sm:$0xff] %v621
    %819 = vst.msk [vmem:[#allocation2 + $0x98] sm:$0xff] %vm800, %v622
    %820 = vst [vmem:[#allocation2 + $0xa0] sm:$0xff] %v623
    %821 = vst.msk [vmem:[#allocation2 + $0xa8] sm:$0xff] %vm800, %v624
    %822 = vst [vmem:[#allocation2 + $0xb0] sm:$0xff] %v625
    %823 = vst.msk [vmem:[#allocation2 + $0xb8] sm:$0xff] %vm800, %v626
    %824 = vst [vmem:[#allocation2 + $0xc0] sm:$0xff] %v627
    %825 = vst.msk [vmem:[#allocation2 + $0xc8] sm:$0xff] %vm800, %v628
    %826 = vst [vmem:[#allocation2 + $0xd0] sm:$0xff] %v629
    %827 = vst.msk [vmem:[#allocation2 + $0xd8] sm:$0xff] %vm800, %v630
    %828 = vst [vmem:[#allocation2 + $0xe0] sm:$0xff] %v631
    %829 = vst.msk [vmem:[#allocation2 + $0xe8] sm:$0xff] %vm800, %v632
    %830 = vst [vmem:[#allocation2 + $0xf0] sm:$0xff] %v633
    %831 = vst.msk [vmem:[#allocation2 + $0xf8] sm:$0xff] %vm800, %v634
    %832 = vst [vmem:[#allocation2 + $0x100] sm:$0xff] %v635
    %833 = vst.msk [vmem:[#allocation2 + $0x108] sm:$0xff] %vm800, %v636
    %834 = vst [vmem:[#allocation2 + $0x110] sm:$0xff] %v637
    %835 = vst.msk [vmem:[#allocation2 + $0x118] sm:$0xff] %vm800, %v638
    %836 = vst [vmem:[#allocation2 + $0x120] sm:$0xff] %v639
    %837 = vst.msk [vmem:[#allocation2 + $0x128] sm:$0xff] %vm800, %v640
    %838 = vst [vmem:[#allocation2 + $0x130] sm:$0xff] %v641
    %839 = vst.msk [vmem:[#allocation2 + $0x138] sm:$0xff] %vm800, %v642
    %840 = vst [vmem:[#allocation2 + $0x140] sm:$0xff] %v643
    %841 = vst.msk [vmem:[#allocation2 + $0x148] sm:$0xff] %vm800, %v644
    %842 = vst [vmem:[#allocation2 + $0x150] sm:$0xff] %v645
    %843 = vst.msk [vmem:[#allocation2 + $0x158] sm:$0xff] %vm800, %v646
    %844 = vst [vmem:[#allocation2 + $0x160] sm:$0xff] %v647
    %845 = vst.msk [vmem:[#allocation2 + $0x168] sm:$0xff] %vm800, %v648
    %846 = vst [vmem:[#allocation2 + $0x170] sm:$0xff] %v649
    %847 = vst.msk [vmem:[#allocation2 + $0x178] sm:$0xff] %vm800, %v650
    %848 = vst [vmem:[#allocation2 + $0x180] sm:$0xff] %v651
    %849 = vst.msk [vmem:[#allocation2 + $0x188] sm:$0xff] %vm800, %v652
    %850 = vst [vmem:[#allocation2 + $0x190] sm:$0xff] %v653
    %851 = vst.msk [vmem:[#allocation2 + $0x198] sm:$0xff] %vm800, %v654
    %852 = vst [vmem:[#allocation2 + $0x1a0] sm:$0xff] %v655
    %853 = vst.msk [vmem:[#allocation2 + $0x1a8] sm:$0xff] %vm800, %v656
    %854 = vst [vmem:[#allocation2 + $0x1b0] sm:$0xff] %v657
    %855 = vst.msk [vmem:[#allocation2 + $0x1b8] sm:$0xff] %vm800, %v658
    %856 = vst [vmem:[#allocation2 + $0x1c0] sm:$0xff] %v659
    %857 = vst.msk [vmem:[#allocation2 + $0x1c8] sm:$0xff] %vm800, %v660
    %858 = vst [vmem:[#allocation2 + $0x1d0] sm:$0xff] %v661
    %859 = vst.msk [vmem:[#allocation2 + $0x1d8] sm:$0xff] %vm800, %v662
    %860 = vst [vmem:[#allocation2 + $0x1e0] sm:$0xff] %v663
    %861 = vst.msk [vmem:[#allocation2 + $0x1e8] sm:$0xff] %vm800, %v664
    %862 = vst [vmem:[#allocation2 + $0x1f0] sm:$0xff] %v665
    %863 = vst.msk [vmem:[#allocation2 + $0x1f8] sm:$0xff] %vm800, %v666
    %864 = vst [vmem:[#allocation2 + $0x200] sm:$0xff] %v667
    %865 = vst.msk [vmem:[#allocation2 + $0x208] sm:$0xff] %vm800, %v668
    %866 = vst [vmem:[#allocation2 + $0x210] sm:$0xff] %v669
    %867 = vst.msk [vmem:[#allocation2 + $0x218] sm:$0xff] %vm800, %v670
    %868 = vst [vmem:[#allocation2 + $0x220] sm:$0xff] %v671
    %869 = vst.msk [vmem:[#allocation2 + $0x228] sm:$0xff] %vm800, %v672
    %870 = vst [vmem:[#allocation2 + $0x230] sm:$0xff] %v673
    %871 = vst.msk [vmem:[#allocation2 + $0x238] sm:$0xff] %vm800, %v674
    %872 = vst [vmem:[#allocation2 + $0x240] sm:$0xff] %v675
    %873 = vst.msk [vmem:[#allocation2 + $0x248] sm:$0xff] %vm800, %v676
    %874 = vst [vmem:[#allocation2 + $0x250] sm:$0xff] %v677
    %875 = vst.msk [vmem:[#allocation2 + $0x258] sm:$0xff] %vm800, %v678
    %876 = vst [vmem:[#allocation2 + $0x260] sm:$0xff] %v679
    %877 = vst.msk [vmem:[#allocation2 + $0x268] sm:$0xff] %vm800, %v680
    %878 = vst [vmem:[#allocation2 + $0x270] sm:$0xff] %v681
    %879 = vst.msk [vmem:[#allocation2 + $0x278] sm:$0xff] %vm800, %v682
    %880 = vst [vmem:[#allocation2 + $0x280] sm:$0xff] %v683
    %881 = vst.msk [vmem:[#allocation2 + $0x288] sm:$0xff] %vm800, %v684
    %882 = vst [vmem:[#allocation2 + $0x290] sm:$0xff] %v685
    %883 = vst.msk [vmem:[#allocation2 + $0x298] sm:$0xff] %vm800, %v686
    %884 = vst [vmem:[#allocation2 + $0x2a0] sm:$0xff] %v687
    %885 = vst.msk [vmem:[#allocation2 + $0x2a8] sm:$0xff] %vm800, %v688
    %886 = vst [vmem:[#allocation2 + $0x2b0] sm:$0xff] %v689
    %887 = vst.msk [vmem:[#allocation2 + $0x2b8] sm:$0xff] %vm800, %v690
    %888 = vst [vmem:[#allocation2 + $0x2c0] sm:$0xff] %v691
    %889 = vst.msk [vmem:[#allocation2 + $0x2c8] sm:$0xff] %vm800, %v692
    %890 = vst [vmem:[#allocation2 + $0x2d0] sm:$0xff] %v693
    %891 = vst.msk [vmem:[#allocation2 + $0x2d8] sm:$0xff] %vm800, %v694
    %892 = vst [vmem:[#allocation2 + $0x2e0] sm:$0xff] %v695
    %893 = vst.msk [vmem:[#allocation2 + $0x2e8] sm:$0xff] %vm800, %v696
    %894 = vst [vmem:[#allocation2 + $0x2f0] sm:$0xff] %v697
    %895 = vst.msk [vmem:[#allocation2 + $0x2f8] sm:$0xff] %vm800, %v698
    %896 = vst [vmem:[#allocation2 + $0x300] sm:$0xff] %v699
    %897 = vst.msk [vmem:[#allocation2 + $0x308] sm:$0xff] %vm800, %v700
    %898 = vst [vmem:[#allocation2 + $0x310] sm:$0xff] %v701
    %899 = vst.msk [vmem:[#allocation2 + $0x318] sm:$0xff] %vm800, %v702
    %900 = vst [vmem:[#allocation2 + $0x320] sm:$0xff] %v703
    %901 = vst.msk [vmem:[#allocation2 + $0x328] sm:$0xff] %vm800, %v704
    %902 = vst [vmem:[#allocation2 + $0x330] sm:$0xff] %v705
    %903 = vst.msk [vmem:[#allocation2 + $0x338] sm:$0xff] %vm800, %v706
    %904 = vst [vmem:[#allocation2 + $0x340] sm:$0xff] %v707
    %905 = vst.msk [vmem:[#allocation2 + $0x348] sm:$0xff] %vm800, %v708
    %906 = vst [vmem:[#allocation2 + $0x350] sm:$0xff] %v709
    %907 = vst.msk [vmem:[#allocation2 + $0x358] sm:$0xff] %vm800, %v710
    %908 = vst [vmem:[#allocation2 + $0x360] sm:$0xff] %v711
    %909 = vst.msk [vmem:[#allocation2 + $0x368] sm:$0xff] %vm800, %v712
    %910 = vst [vmem:[#allocation2 + $0x370] sm:$0xff] %v713
    %911 = vst.msk [vmem:[#allocation2 + $0x378] sm:$0xff] %vm800, %v714
    %912 = vst [vmem:[#allocation2 + $0x380] sm:$0xff] %v715
    %913 = vst.msk [vmem:[#allocation2 + $0x388] sm:$0xff] %vm800, %v716
    %914 = vst [vmem:[#allocation2 + $0x390] sm:$0xff] %v717
    %915 = vst.msk [vmem:[#allocation2 + $0x398] sm:$0xff] %vm800, %v718
    %916 = vst [vmem:[#allocation2 + $0x3a0] sm:$0xff] %v719
    %917 = vst.msk [vmem:[#allocation2 + $0x3a8] sm:$0xff] %vm800, %v720
    %918 = vst [vmem:[#allocation2 + $0x3b0] sm:$0xff] %v721
    %919 = vst.msk [vmem:[#allocation2 + $0x3b8] sm:$0xff] %vm800, %v722
    %920 = vst [vmem:[#allocation2 + $0x3c0] sm:$0xff] %v723
    %921 = vst.msk [vmem:[#allocation2 + $0x3c8] sm:$0xff] %vm800, %v724
    %922 = vst [vmem:[#allocation2 + $0x3d0] sm:$0xff] %v725
    %923 = vst.msk [vmem:[#allocation2 + $0x3d8] sm:$0xff] %vm800, %v726
    %924 = vst [vmem:[#allocation2 + $0x3e0] sm:$0xff] %v727
    %925 = vst.msk [vmem:[#allocation2 + $0x3e8] sm:$0xff] %vm800, %v728
    %926 = vst [vmem:[#allocation2 + $0x3f0] sm:$0xff] %v729
    %927 = vst.msk [vmem:[#allocation2 + $0x3f8] sm:$0xff] %vm800, %v730
    %928 = vst [vmem:[#allocation2 + $0x400] sm:$0xff] %v731
    %929 = vst.msk [vmem:[#allocation2 + $0x408] sm:$0xff] %vm800, %v732
    %930 = vst [vmem:[#allocation2 + $0x410] sm:$0xff] %v733
    %931 = vst.msk [vmem:[#allocation2 + $0x418] sm:$0xff] %vm800, %v734
    %932 = vst [vmem:[#allocation2 + $0x420] sm:$0xff] %v735
    %933 = vst.msk [vmem:[#allocation2 + $0x428] sm:$0xff] %vm800, %v736
    %934 = vst [vmem:[#allocation2 + $0x430] sm:$0xff] %v737
    %935 = vst.msk [vmem:[#allocation2 + $0x438] sm:$0xff] %vm800, %v738
    %936 = vst [vmem:[#allocation2 + $0x440] sm:$0xff] %v739
    %937 = vst.msk [vmem:[#allocation2 + $0x448] sm:$0xff] %vm800, %v740
    %938 = vst [vmem:[#allocation2 + $0x450] sm:$0xff] %v741
    %939 = vst.msk [vmem:[#allocation2 + $0x458] sm:$0xff] %vm800, %v742
    %940 = vst [vmem:[#allocation2 + $0x460] sm:$0xff] %v743
    %941 = vst.msk [vmem:[#allocation2 + $0x468] sm:$0xff] %vm800, %v744
    %942 = vst [vmem:[#allocation2 + $0x470] sm:$0xff] %v745
    %943 = vst.msk [vmem:[#allocation2 + $0x478] sm:$0xff] %vm800, %v746
    %944 = vst [vmem:[#allocation2 + $0x480] sm:$0xff] %v747
    %945 = vst.msk [vmem:[#allocation2 + $0x488] sm:$0xff] %vm800, %v748
    %946 = vst [vmem:[#allocation2 + $0x490] sm:$0xff] %v749
    %947 = vst.msk [vmem:[#allocation2 + $0x498] sm:$0xff] %vm800, %v750
    %948 = vst [vmem:[#allocation2 + $0x4a0] sm:$0xff] %v751
    %949 = vst.msk [vmem:[#allocation2 + $0x4a8] sm:$0xff] %vm800, %v752
    %950 = vst [vmem:[#allocation2 + $0x4b0] sm:$0xff] %v753
    %951 = vst.msk [vmem:[#allocation2 + $0x4b8] sm:$0xff] %vm800, %v754
    %952 = vst [vmem:[#allocation2 + $0x4c0] sm:$0xff] %v755
    %953 = vst.msk [vmem:[#allocation2 + $0x4c8] sm:$0xff] %vm800, %v756
    %954 = vst [vmem:[#allocation2 + $0x4d0] sm:$0xff] %v757
    %955 = vst.msk [vmem:[#allocation2 + $0x4d8] sm:$0xff] %vm800, %v758
    %956 = vst [vmem:[#allocation2 + $0x4e0] sm:$0xff] %v759
    %957 = vst.msk [vmem:[#allocation2 + $0x4e8] sm:$0xff] %vm800, %v760
    %958 = vst [vmem:[#allocation2 + $0x4f0] sm:$0xff] %v761
    %959 = vst.msk [vmem:[#allocation2 + $0x4f8] sm:$0xff] %vm800, %v762
    %960 = vst [vmem:[#allocation2 + $0x500] sm:$0xff] %v763
    %961 = vst.msk [vmem:[#allocation2 + $0x508] sm:$0xff] %vm800, %v764
    %962 = vst [vmem:[#allocation2 + $0x510] sm:$0xff] %v765
    %963 = vst.msk [vmem:[#allocation2 + $0x518] sm:$0xff] %vm800, %v766
    %964 = vst [vmem:[#allocation2 + $0x520] sm:$0xff] %v767
    %965 = vst.msk [vmem:[#allocation2 + $0x528] sm:$0xff] %vm800, %v768
    %966 = vst [vmem:[#allocation2 + $0x530] sm:$0xff] %v769
    %967 = vst.msk [vmem:[#allocation2 + $0x538] sm:$0xff] %vm800, %v770
    %968 = vst [vmem:[#allocation2 + $0x540] sm:$0xff] %v771
    %969 = vst.msk [vmem:[#allocation2 + $0x548] sm:$0xff] %vm800, %v772
    %970 = vst [vmem:[#allocation2 + $0x550] sm:$0xff] %v773
    %971 = vst.msk [vmem:[#allocation2 + $0x558] sm:$0xff] %vm800, %v774
    %972 = vst [vmem:[#allocation2 + $0x560] sm:$0xff] %v775
    %973 = vst.msk [vmem:[#allocation2 + $0x568] sm:$0xff] %vm800, %v776
    %974 = vst [vmem:[#allocation2 + $0x570] sm:$0xff] %v777
    %975 = vst.msk [vmem:[#allocation2 + $0x578] sm:$0xff] %vm800, %v778
    %976 = vst [vmem:[#allocation2 + $0x580] sm:$0xff] %v779
    %977 = vst.msk [vmem:[#allocation2 + $0x588] sm:$0xff] %vm800, %v780
    %978 = vst [vmem:[#allocation2 + $0x590] sm:$0xff] %v781
    %979 = vst.msk [vmem:[#allocation2 + $0x598] sm:$0xff] %vm800, %v782
    %980 = vst [vmem:[#allocation2 + $0x5a0] sm:$0xff] %v783
    %981 = vst.msk [vmem:[#allocation2 + $0x5a8] sm:$0xff] %vm800, %v784
    %982 = vst [vmem:[#allocation2 + $0x5b0] sm:$0xff] %v785
    %983 = vst.msk [vmem:[#allocation2 + $0x5b8] sm:$0xff] %vm800, %v786
    %984 = vst [vmem:[#allocation2 + $0x5c0] sm:$0xff] %v787
    %985 = vst.msk [vmem:[#allocation2 + $0x5c8] sm:$0xff] %vm800, %v788
    %986 = vst [vmem:[#allocation2 + $0x5d0] sm:$0xff] %v789
    %987 = vst.msk [vmem:[#allocation2 + $0x5d8] sm:$0xff] %vm800, %v790
    %988 = vst [vmem:[#allocation2 + $0x5e0] sm:$0xff] %v791
    %989 = vst.msk [vmem:[#allocation2 + $0x5e8] sm:$0xff] %vm800, %v792
    %990 = vst [vmem:[#allocation2 + $0x5f0] sm:$0xff] %v793
    %991 = vst.msk [vmem:[#allocation2 + $0x5f8] sm:$0xff] %vm800, %v794
    %992 = vst [vmem:[#allocation2 + $0x600] sm:$0xff] %v795
    %993 = vst.msk [vmem:[#allocation2 + $0x608] sm:$0xff] %vm800, %v796
    %994 = vst [vmem:[#allocation2 + $0x610] sm:$0xff] %v797
    %995 = vst.msk [vmem:[#allocation2 + $0x618] sm:$0xff] %vm800, %v798
    %v996 = vld [vmem:[%s2] sm:$0xff]
    %v997 = vld [vmem:[%s2 + $0x8] sm:$0xff]
    %v998 = vld [vmem:[%s2 + $0x10] sm:$0xff]
    %v999 = vld [vmem:[%s2 + $0x18] sm:$0xf]
    %v1000 = vld [vmem:[#allocation2] sm:$0xff]
    %v1001 = vld [vmem:[#allocation2 + $0x8] sm:$0xff]
    %v1002 = vld [vmem:[#allocation2 + $0x10] sm:$0xff]
    %v1003 = vld [vmem:[#allocation2 + $0x18] sm:$0xff]
    %v1004 = vld [vmem:[#allocation2 + $0x20] sm:$0xff]
    %v1005 = vld [vmem:[#allocation2 + $0x28] sm:$0xff]
    %v1006 = vld [vmem:[#allocation2 + $0x30] sm:$0xff]
    %v1007 = vld [vmem:[#allocation2 + $0x38] sm:$0xff]
    %v1008 = vld [vmem:[#allocation2 + $0x40] sm:$0xff]
    %v1009 = vld [vmem:[#allocation2 + $0x48] sm:$0xff]
    %v1010 = vld [vmem:[#allocation2 + $0x50] sm:$0xff]
    %v1011 = vld [vmem:[#allocation2 + $0x58] sm:$0xff]
    %v1012 = vld [vmem:[#allocation2 + $0x60] sm:$0xff]
    %v1013 = vld [vmem:[#allocation2 + $0x68] sm:$0xff]
    %v1014 = vld [vmem:[#allocation2 + $0x70] sm:$0xff]
    %v1015 = vld [vmem:[#allocation2 + $0x78] sm:$0xff]
    %v1016 = vld [vmem:[#allocation2 + $0x80] sm:$0xff]
    %v1017 = vld [vmem:[#allocation2 + $0x88] sm:$0xff]
    %v1018 = vld [vmem:[#allocation2 + $0x90] sm:$0xff]
    %v1019 = vld [vmem:[#allocation2 + $0x98] sm:$0xff]
    %v1020 = vld [vmem:[#allocation2 + $0xa0] sm:$0xff]
    %v1021 = vld [vmem:[#allocation2 + $0xa8] sm:$0xff]
    %v1022 = vld [vmem:[#allocation2 + $0xb0] sm:$0xff]
    %v1023 = vld [vmem:[#allocation2 + $0xb8] sm:$0xff]
    %v1024 = vld [vmem:[#allocation2 + $0xc0] sm:$0xff]
    %v1025 = vld [vmem:[#allocation2 + $0xc8] sm:$0xff]
    %v1026 = vld [vmem:[#allocation2 + $0xd0] sm:$0xff]
    %v1027 = vld [vmem:[#allocation2 + $0xd8] sm:$0xff]
    %v1028 = vld [vmem:[#allocation2 + $0xe0] sm:$0xff]
    %v1029 = vld [vmem:[#allocation2 + $0xe8] sm:$0xff]
    %v1030 = vld [vmem:[#allocation2 + $0xf0] sm:$0xff]
    %v1031 = vld [vmem:[#allocation2 + $0xf8] sm:$0xff]
    %v1032 = vld [vmem:[#allocation2 + $0x100] sm:$0xff]
    %v1033 = vld [vmem:[#allocation2 + $0x108] sm:$0xff]
    %v1034 = vld [vmem:[#allocation2 + $0x110] sm:$0xff]
    %v1035 = vld [vmem:[#allocation2 + $0x118] sm:$0xff]
    %v1036 = vld [vmem:[#allocation2 + $0x120] sm:$0xff]
    %v1037 = vld [vmem:[#allocation2 + $0x128] sm:$0xff]
    %v1038 = vld [vmem:[#allocation2 + $0x130] sm:$0xff]
    %v1039 = vld [vmem:[#allocation2 + $0x138] sm:$0xff]
    %v1040 = vld [vmem:[#allocation2 + $0x140] sm:$0xff]
    %v1041 = vld [vmem:[#allocation2 + $0x148] sm:$0xff]
    %v1042 = vld [vmem:[#allocation2 + $0x150] sm:$0xff]
    %v1043 = vld [vmem:[#allocation2 + $0x158] sm:$0xff]
    %v1044 = vld [vmem:[#allocation2 + $0x160] sm:$0xff]
    %v1045 = vld [vmem:[#allocation2 + $0x168] sm:$0xff]
    %v1046 = vld [vmem:[#allocation2 + $0x170] sm:$0xff]
    %v1047 = vld [vmem:[#allocation2 + $0x178] sm:$0xff]
    %v1048 = vld [vmem:[#allocation2 + $0x180] sm:$0xff]
    %v1049 = vld [vmem:[#allocation2 + $0x188] sm:$0xff]
    %v1050 = vld [vmem:[#allocation2 + $0x190] sm:$0xff]
    %v1051 = vld [vmem:[#allocation2 + $0x198] sm:$0xff]
    %v1052 = vld [vmem:[#allocation2 + $0x1a0] sm:$0xff]
    %v1053 = vld [vmem:[#allocation2 + $0x1a8] sm:$0xff]
    %v1054 = vld [vmem:[#allocation2 + $0x1b0] sm:$0xff]
    %v1055 = vld [vmem:[#allocation2 + $0x1b8] sm:$0xff]
    %v1056 = vld [vmem:[#allocation2 + $0x1c0] sm:$0xff]
    %v1057 = vld [vmem:[#allocation2 + $0x1c8] sm:$0xff]
    %v1058 = vld [vmem:[#allocation2 + $0x1d0] sm:$0xff]
    %v1059 = vld [vmem:[#allocation2 + $0x1d8] sm:$0xff]
    %v1060 = vld [vmem:[#allocation2 + $0x1e0] sm:$0xff]
    %v1061 = vld [vmem:[#allocation2 + $0x1e8] sm:$0xff]
    %v1062 = vld [vmem:[#allocation2 + $0x1f0] sm:$0xff]
    %v1063 = vld [vmem:[#allocation2 + $0x1f8] sm:$0xff]
    %v1064 = vld [vmem:[#allocation2 + $0x200] sm:$0xff]
    %v1065 = vld [vmem:[#allocation2 + $0x208] sm:$0xff]
    %v1066 = vld [vmem:[#allocation2 + $0x210] sm:$0xff]
    %v1067 = vld [vmem:[#allocation2 + $0x218] sm:$0xff]
    %v1068 = vld [vmem:[#allocation2 + $0x220] sm:$0xff]
    %v1069 = vld [vmem:[#allocation2 + $0x228] sm:$0xff]
    %v1070 = vld [vmem:[#allocation2 + $0x230] sm:$0xff]
    %v1071 = vld [vmem:[#allocation2 + $0x238] sm:$0xff]
    %v1072 = vld [vmem:[#allocation2 + $0x240] sm:$0xff]
    %v1073 = vld [vmem:[#allocation2 + $0x248] sm:$0xff]
    %v1074 = vld [vmem:[#allocation2 + $0x250] sm:$0xff]
    %v1075 = vld [vmem:[#allocation2 + $0x258] sm:$0xff]
    %v1076 = vld [vmem:[#allocation2 + $0x260] sm:$0xff]
    %v1077 = vld [vmem:[#allocation2 + $0x268] sm:$0xff]
    %v1078 = vld [vmem:[#allocation2 + $0x270] sm:$0xff]
    %v1079 = vld [vmem:[#allocation2 + $0x278] sm:$0xff]
    %v1080 = vld [vmem:[#allocation2 + $0x280] sm:$0xff]
    %v1081 = vld [vmem:[#allocation2 + $0x288] sm:$0xff]
    %v1082 = vld [vmem:[#allocation2 + $0x290] sm:$0xff]
    %v1083 = vld [vmem:[#allocation2 + $0x298] sm:$0xff]
    %v1084 = vld [vmem:[#allocation2 + $0x2a0] sm:$0xff]
    %v1085 = vld [vmem:[#allocation2 + $0x2a8] sm:$0xff]
    %v1086 = vld [vmem:[#allocation2 + $0x2b0] sm:$0xff]
    %v1087 = vld [vmem:[#allocation2 + $0x2b8] sm:$0xff]
    %v1088 = vld [vmem:[#allocation2 + $0x2c0] sm:$0xff]
    %v1089 = vld [vmem:[#allocation2 + $0x2c8] sm:$0xff]
    %v1090 = vld [vmem:[#allocation2 + $0x2d0] sm:$0xff]
    %v1091 = vld [vmem:[#allocation2 + $0x2d8] sm:$0xff]
    %v1092 = vld [vmem:[#allocation2 + $0x2e0] sm:$0xff]
    %v1093 = vld [vmem:[#allocation2 + $0x2e8] sm:$0xff]
    %v1094 = vld [vmem:[#allocation2 + $0x2f0] sm:$0xff]
    %v1095 = vld [vmem:[#allocation2 + $0x2f8] sm:$0xff]
    %v1096 = vld [vmem:[#allocation2 + $0x300] sm:$0xff]
    %v1097 = vld [vmem:[#allocation2 + $0x308] sm:$0xff]
    %v1098 = vld [vmem:[#allocation2 + $0x310] sm:$0xff]
    %v1099 = vld [vmem:[#allocation2 + $0x318] sm:$0xff]
    %v1100 = vld [vmem:[#allocation2 + $0x320] sm:$0xff]
    %v1101 = vld [vmem:[#allocation2 + $0x328] sm:$0xff]
    %v1102 = vld [vmem:[#allocation2 + $0x330] sm:$0xff]
    %v1103 = vld [vmem:[#allocation2 + $0x338] sm:$0xff]
    %v1104 = vld [vmem:[#allocation2 + $0x340] sm:$0xff]
    %v1105 = vld [vmem:[#allocation2 + $0x348] sm:$0xff]
    %v1106 = vld [vmem:[#allocation2 + $0x350] sm:$0xff]
    %v1107 = vld [vmem:[#allocation2 + $0x358] sm:$0xff]
    %v1108 = vld [vmem:[#allocation2 + $0x360] sm:$0xff]
    %v1109 = vld [vmem:[#allocation2 + $0x368] sm:$0xff]
    %v1110 = vld [vmem:[#allocation2 + $0x370] sm:$0xff]
    %v1111 = vld [vmem:[#allocation2 + $0x378] sm:$0xff]
    %v1112 = vld [vmem:[#allocation2 + $0x380] sm:$0xff]
    %v1113 = vld [vmem:[#allocation2 + $0x388] sm:$0xff]
    %v1114 = vld [vmem:[#allocation2 + $0x390] sm:$0xff]
    %v1115 = vld [vmem:[#allocation2 + $0x398] sm:$0xff]
    %v1116 = vld [vmem:[#allocation2 + $0x3a0] sm:$0xff]
    %v1117 = vld [vmem:[#allocation2 + $0x3a8] sm:$0xff]
    %v1118 = vld [vmem:[#allocation2 + $0x3b0] sm:$0xff]
    %v1119 = vld [vmem:[#allocation2 + $0x3b8] sm:$0xff]
    %v1120 = vld [vmem:[#allocation2 + $0x3c0] sm:$0xff]
    %v1121 = vld [vmem:[#allocation2 + $0x3c8] sm:$0xff]
    %v1122 = vld [vmem:[#allocation2 + $0x3d0] sm:$0xff]
    %v1123 = vld [vmem:[#allocation2 + $0x3d8] sm:$0xff]
    %v1124 = vld [vmem:[#allocation2 + $0x3e0] sm:$0xff]
    %v1125 = vld [vmem:[#allocation2 + $0x3e8] sm:$0xff]
    %v1126 = vld [vmem:[#allocation2 + $0x3f0] sm:$0xff]
    %v1127 = vld [vmem:[#allocation2 + $0x3f8] sm:$0xff]
    %v1128 = vld [vmem:[#allocation2 + $0x400] sm:$0xff]
    %v1129 = vld [vmem:[#allocation2 + $0x408] sm:$0xff]
    %v1130 = vld [vmem:[#allocation2 + $0x410] sm:$0xff]
    %v1131 = vld [vmem:[#allocation2 + $0x418] sm:$0xff]
    %v1132 = vld [vmem:[#allocation2 + $0x420] sm:$0xff]
    %v1133 = vld [vmem:[#allocation2 + $0x428] sm:$0xff]
    %v1134 = vld [vmem:[#allocation2 + $0x430] sm:$0xff]
    %v1135 = vld [vmem:[#allocation2 + $0x438] sm:$0xff]
    %v1136 = vld [vmem:[#allocation2 + $0x440] sm:$0xff]
    %v1137 = vld [vmem:[#allocation2 + $0x448] sm:$0xff]
    %v1138 = vld [vmem:[#allocation2 + $0x450] sm:$0xff]
    %v1139 = vld [vmem:[#allocation2 + $0x458] sm:$0xff]
    %v1140 = vld [vmem:[#allocation2 + $0x460] sm:$0xff]
    %v1141 = vld [vmem:[#allocation2 + $0x468] sm:$0xff]
    %v1142 = vld [vmem:[#allocation2 + $0x470] sm:$0xff]
    %v1143 = vld [vmem:[#allocation2 + $0x478] sm:$0xff]
    %v1144 = vld [vmem:[#allocation2 + $0x480] sm:$0xff]
    %v1145 = vld [vmem:[#allocation2 + $0x488] sm:$0xff]
    %v1146 = vld [vmem:[#allocation2 + $0x490] sm:$0xff]
    %v1147 = vld [vmem:[#allocation2 + $0x498] sm:$0xff]
    %v1148 = vld [vmem:[#allocation2 + $0x4a0] sm:$0xff]
    %v1149 = vld [vmem:[#allocation2 + $0x4a8] sm:$0xff]
    %v1150 = vld [vmem:[#allocation2 + $0x4b0] sm:$0xff]
    %v1151 = vld [vmem:[#allocation2 + $0x4b8] sm:$0xff]
    %v1152 = vld [vmem:[#allocation2 + $0x4c0] sm:$0xff]
    %v1153 = vld [vmem:[#allocation2 + $0x4c8] sm:$0xff]
    %v1154 = vld [vmem:[#allocation2 + $0x4d0] sm:$0xff]
    %v1155 = vld [vmem:[#allocation2 + $0x4d8] sm:$0xff]
    %v1156 = vld [vmem:[#allocation2 + $0x4e0] sm:$0xff]
    %v1157 = vld [vmem:[#allocation2 + $0x4e8] sm:$0xff]
    %v1158 = vld [vmem:[#allocation2 + $0x4f0] sm:$0xff]
    %v1159 = vld [vmem:[#allocation2 + $0x4f8] sm:$0xff]
    %v1160 = vld [vmem:[#allocation2 + $0x500] sm:$0xff]
    %v1161 = vld [vmem:[#allocation2 + $0x508] sm:$0xff]
    %v1162 = vld [vmem:[#allocation2 + $0x510] sm:$0xff]
    %v1163 = vld [vmem:[#allocation2 + $0x518] sm:$0xff]
    %v1164 = vld [vmem:[#allocation2 + $0x520] sm:$0xff]
    %v1165 = vld [vmem:[#allocation2 + $0x528] sm:$0xff]
    %v1166 = vld [vmem:[#allocation2 + $0x530] sm:$0xff]
    %v1167 = vld [vmem:[#allocation2 + $0x538] sm:$0xff]
    %v1168 = vld [vmem:[#allocation2 + $0x540] sm:$0xff]
    %v1169 = vld [vmem:[#allocation2 + $0x548] sm:$0xff]
    %v1170 = vld [vmem:[#allocation2 + $0x550] sm:$0xff]
    %v1171 = vld [vmem:[#allocation2 + $0x558] sm:$0xff]
    %v1172 = vld [vmem:[#allocation2 + $0x560] sm:$0xff]
    %v1173 = vld [vmem:[#allocation2 + $0x568] sm:$0xff]
    %v1174 = vld [vmem:[#allocation2 + $0x570] sm:$0xff]
    %v1175 = vld [vmem:[#allocation2 + $0x578] sm:$0xff]
    %v1176 = vld [vmem:[#allocation2 + $0x580] sm:$0xff]
    %v1177 = vld [vmem:[#allocation2 + $0x588] sm:$0xff]
    %v1178 = vld [vmem:[#allocation2 + $0x590] sm:$0xff]
    %v1179 = vld [vmem:[#allocation2 + $0x598] sm:$0xff]
    %v1180 = vld [vmem:[#allocation2 + $0x5a0] sm:$0xff]
    %v1181 = vld [vmem:[#allocation2 + $0x5a8] sm:$0xff]
    %v1182 = vld [vmem:[#allocation2 + $0x5b0] sm:$0xff]
    %v1183 = vld [vmem:[#allocation2 + $0x5b8] sm:$0xff]
    %v1184 = vld [vmem:[#allocation2 + $0x5c0] sm:$0xff]
    %v1185 = vld [vmem:[#allocation2 + $0x5c8] sm:$0xff]
    %v1186 = vld [vmem:[#allocation2 + $0x5d0] sm:$0xff]
    %v1187 = vld [vmem:[#allocation2 + $0x5d8] sm:$0xff]
    %v1188 = vld [vmem:[#allocation2 + $0x5e0] sm:$0xff]
    %v1189 = vld [vmem:[#allocation2 + $0x5e8] sm:$0xff]
    %v1190 = vld [vmem:[#allocation2 + $0x5f0] sm:$0xff]
    %v1191 = vld [vmem:[#allocation2 + $0x5f8] sm:$0xff]
    %v1192 = vld [vmem:[#allocation2 + $0x600] sm:$0xff]
    %v1193 = vld [vmem:[#allocation2 + $0x608] sm:$0xff]
    %v1194 = vld [vmem:[#allocation2 + $0x610] sm:$0xff]
    %v1195 = vld [vmem:[#allocation2 + $0x618] sm:$0xff]
    %1200 = vst [vmem:[#allocation1] ss:$2 sm:$0xff] %v996
    %s1201 = scalar_lea.vmem [#allocation1], 16
    %1202 = vst [vmem:[%s1201] ss:$2 sm:$0xff] %v997
    %s1203 = scalar_lea.vmem [#allocation1], 32
    %1204 = vst [vmem:[%s1203] ss:$2 sm:$0xff] %v998
    %s1205 = scalar_lea.vmem [#allocation1], 48
    %1206 = vst [vmem:[%s1205] ss:$2 sm:$0xff] %v999
    %v1207 = vld.sshfl [vmem:[#allocation1] sm:$0xff pattern:$0x75316420]
    %v1208 = vld.sshfl [vmem:[#allocation1 + $0x8] sm:$0xff pattern:$0x75316420]
    %v1209 = vld.sshfl [vmem:[#allocation1 + $0x10] sm:$0xff pattern:$0x75316420]
    %v1210 = vld.sshfl [vmem:[#allocation1 + $0x18] sm:$0xff pattern:$0x75316420]
    %v1211 = vld.sshfl [vmem:[#allocation1 + $0x20] sm:$0xff pattern:$0x75316420]
    %v1212 = vld.sshfl [vmem:[#allocation1 + $0x28] sm:$0xff pattern:$0x75316420]
    %v1213 = vld.sshfl [vmem:[#allocation1 + $0x30] sm:$0xff pattern:$0x75316420]
    %vm1220 = vcmask 130048
    %v1221 = vsel %vm1220, %v1213, 0
    %1223 = vmatpush.msra.mxu0 %v1030
    %1224 = vmatpush.msra.mxu0 %v1028
    %1225 = vmatpush.msra.mxu0 %v1026
    %1226 = vmatpush.msra.mxu0 %v1024
    %1227 = vmatpush.msra.mxu0 %v1022
    %1228 = vmatpush.msra.mxu0 %v1020
    %1229 = vmatpush.msra.mxu0 %v1018
    %1230 = vmatpush.msra.mxu0 %v1016
    %1231 = vmatpush.msra.mxu0 %v1014
    %1232 = vmatpush.msra.mxu0 %v1012
    %1233 = vmatpush.msra.mxu0 %v1010
    %1234 = vmatpush.msra.mxu0 %v1008
    %1235 = vmatpush.msra.mxu0 %v1006
    %1236 = vmatpush.msra.mxu0 %v1004
    %1237 = vmatpush.msra.mxu0 %v1002
    %1238 = vmatpush.msra.mxu0 %v1000
    %1239 = vmatmul.f32.gmra.mxu0 %v1207
    %v1240 = vpop.f32.mrf.mxu0
    %v1241 = vadd.f32 0.0, %v1240
    %1242 = vdwg.mxu0
    %1243 = vmatpush.msra.mxu0 %v1062
    %1244 = vmatpush.msra.mxu0 %v1060
    %1245 = vmatpush.msra.mxu0 %v1058
    %1246 = vmatpush.msra.mxu0 %v1056
    %1247 = vmatpush.msra.mxu0 %v1054
    %1248 = vmatpush.msra.mxu0 %v1052
    %1249 = vmatpush.msra.mxu0 %v1050
    %1250 = vmatpush.msra.mxu0 %v1048
    %1251 = vmatpush.msra.mxu0 %v1046
    %1252 = vmatpush.msra.mxu0 %v1044
    %1253 = vmatpush.msra.mxu0 %v1042
    %1254 = vmatpush.msra.mxu0 %v1040
    %1255 = vmatpush.msra.mxu0 %v1038
    %1256 = vmatpush.msra.mxu0 %v1036
    %1257 = vmatpush.msra.mxu0 %v1034
    %1258 = vmatpush.msra.mxu0 %v1032
    %1259 = vmatmul.f32.gmra.mxu0 %v1208
    %v1260 = vpop.f32.mrf.mxu0
    %v1261 = vadd.f32 %v1241, %v1260
    %1262 = vdwg.mxu0
    %1263 = vmatpush.msra.mxu0 %v1094
    %1264 = vmatpush.msra.mxu0 %v1092
    %1265 = vmatpush.msra.mxu0 %v1090
    %1266 = vmatpush.msra.mxu0 %v1088
    %1267 = vmatpush.msra.mxu0 %v1086
    %1268 = vmatpush.msra.mxu0 %v1084
    %1269 = vmatpush.msra.mxu0 %v1082
    %1270 = vmatpush.msra.mxu0 %v1080
    %1271 = vmatpush.msra.mxu0 %v1078
    %1272 = vmatpush.msra.mxu0 %v1076
    %1273 = vmatpush.msra.mxu0 %v1074
    %1274 = vmatpush.msra.mxu0 %v1072
    %1275 = vmatpush.msra.mxu0 %v1070
    %1276 = vmatpush.msra.mxu0 %v1068
    %1277 = vmatpush.msra.mxu0 %v1066
    %1278 = vmatpush.msra.mxu0 %v1064
    %1279 = vmatmul.f32.gmra.mxu0 %v1209
    %v1280 = vpop.f32.mrf.mxu0
    %v1281 = vadd.f32 %v1261, %v1280
    %1282 = vdwg.mxu0
    %1283 = vmatpush.msra.mxu0 %v1126
    %1284 = vmatpush.msra.mxu0 %v1124
    %1285 = vmatpush.msra.mxu0 %v1122
    %1286 = vmatpush.msra.mxu0 %v1120
    %1287 = vmatpush.msra.mxu0 %v1118
    %1288 = vmatpush.msra.mxu0 %v1116
    %1289 = vmatpush.msra.mxu0 %v1114
    %1290 = vmatpush.msra.mxu0 %v1112
    %1291 = vmatpush.msra.mxu0 %v1110
    %1292 = vmatpush.msra.mxu0 %v1108
    %1293 = vmatpush.msra.mxu0 %v1106
    %1294 = vmatpush.msra.mxu0 %v1104
    %1295 = vmatpush.msra.mxu0 %v1102
    %1296 = vmatpush.msra.mxu0 %v1100
    %1297 = vmatpush.msra.mxu0 %v1098
    %1298 = vmatpush.msra.mxu0 %v1096
    %1299 = vmatmul.f32.gmra.mxu0 %v1210
    %v1300 = vpop.f32.mrf.mxu0
    %v1301 = vadd.f32 %v1281, %v1300
    %1302 = vdwg.mxu0
    %1303 = vmatpush.msra.mxu0 %v1158
    %1304 = vmatpush.msra.mxu0 %v1156
    %1305 = vmatpush.msra.mxu0 %v1154
    %1306 = vmatpush.msra.mxu0 %v1152
    %1307 = vmatpush.msra.mxu0 %v1150
    %1308 = vmatpush.msra.mxu0 %v1148
    %1309 = vmatpush.msra.mxu0 %v1146
    %1310 = vmatpush.msra.mxu0 %v1144
    %1311 = vmatpush.msra.mxu0 %v1142
    %1312 = vmatpush.msra.mxu0 %v1140
    %1313 = vmatpush.msra.mxu0 %v1138
    %1314 = vmatpush.msra.mxu0 %v1136
    %1315 = vmatpush.msra.mxu0 %v1134
    %1316 = vmatpush.msra.mxu0 %v1132
    %1317 = vmatpush.msra.mxu0 %v1130
    %1318 = vmatpush.msra.mxu0 %v1128
    %1319 = vmatmul.f32.gmra.mxu0 %v1211
    %v1320 = vpop.f32.mrf.mxu0
    %v1321 = vadd.f32 %v1301, %v1320
    %1322 = vdwg.mxu0
    %1323 = vmatpush.msra.mxu0 %v1190
    %1324 = vmatpush.msra.mxu0 %v1188
    %1325 = vmatpush.msra.mxu0 %v1186
    %1326 = vmatpush.msra.mxu0 %v1184
    %1327 = vmatpush.msra.mxu0 %v1182
    %1328 = vmatpush.msra.mxu0 %v1180
    %1329 = vmatpush.msra.mxu0 %v1178
    %1330 = vmatpush.msra.mxu0 %v1176
    %1331 = vmatpush.msra.mxu0 %v1174
    %1332 = vmatpush.msra.mxu0 %v1172
    %1333 = vmatpush.msra.mxu0 %v1170
    %1334 = vmatpush.msra.mxu0 %v1168
    %1335 = vmatpush.msra.mxu0 %v1166
    %1336 = vmatpush.msra.mxu0 %v1164
    %1337 = vmatpush.msra.mxu0 %v1162
    %1338 = vmatpush.msra.mxu0 %v1160
    %1339 = vmatmul.f32.gmra.mxu0 %v1212
    %v1340 = vpop.f32.mrf.mxu0
    %v1341 = vadd.f32 %v1321, %v1340
    %1342 = vdwg.mxu0
    %1343 = vmatpush.msra.mxu0 0.0
    %1344 = vmatpush.msra.mxu0 0.0
    %1345 = vmatpush.msra.mxu0 0.0
    %1346 = vmatpush.msra.mxu0 0.0
    %1347 = vmatpush.msra.mxu0 0.0
    %1348 = vmatpush.msra.mxu0 0.0
    %1349 = vmatpush.msra.mxu0 0.0
    %1350 = vmatpush.msra.mxu0 0.0
    %1351 = vmatpush.msra.mxu0 0.0
    %1352 = vmatpush.msra.mxu0 0.0
    %1353 = vmatpush.msra.mxu0 0.0
    %1354 = vmatpush.msra.mxu0 0.0
    %1355 = vmatpush.msra.mxu0 0.0
    %1356 = vmatpush.msra.mxu0 0.0
    %1357 = vmatpush.msra.mxu0 %v1194
    %1358 = vmatpush.msra.mxu0 %v1192
    %1359 = vmatmul.f32.gmra.mxu0 %v1221
    %v1360 = vpop.f32.mrf.mxu0
    %v1361 = vadd.f32 %v1341, %v1360
    %1362 = vdwg.mxu0
    %1363 = vmatpush.msra.mxu0 %v1031
    %1364 = vmatpush.msra.mxu0 %v1029
    %1365 = vmatpush.msra.mxu0 %v1027
    %1366 = vmatpush.msra.mxu0 %v1025
    %1367 = vmatpush.msra.mxu0 %v1023
    %1368 = vmatpush.msra.mxu0 %v1021
    %1369 = vmatpush.msra.mxu0 %v1019
    %1370 = vmatpush.msra.mxu0 %v1017
    %1371 = vmatpush.msra.mxu0 %v1015
    %1372 = vmatpush.msra.mxu0 %v1013
    %1373 = vmatpush.msra.mxu0 %v1011
    %1374 = vmatpush.msra.mxu0 %v1009
    %1375 = vmatpush.msra.mxu0 %v1007
    %1376 = vmatpush.msra.mxu0 %v1005
    %1377 = vmatpush.msra.mxu0 %v1003
    %1378 = vmatpush.msra.mxu0 %v1001
    %1379 = vmatmul.f32.gmra.mxu0 %v1207
    %v1380 = vpop.f32.mrf.mxu0
    %v1381 = vadd.f32 0.0, %v1380
    %1382 = vdwg.mxu0
    %1383 = vmatpush.msra.mxu0 %v1063
    %1384 = vmatpush.msra.mxu0 %v1061
    %1385 = vmatpush.msra.mxu0 %v1059
    %1386 = vmatpush.msra.mxu0 %v1057
    %1387 = vmatpush.msra.mxu0 %v1055
    %1388 = vmatpush.msra.mxu0 %v1053
    %1389 = vmatpush.msra.mxu0 %v1051
    %1390 = vmatpush.msra.mxu0 %v1049
    %1391 = vmatpush.msra.mxu0 %v1047
    %1392 = vmatpush.msra.mxu0 %v1045
    %1393 = vmatpush.msra.mxu0 %v1043
    %1394 = vmatpush.msra.mxu0 %v1041
    %1395 = vmatpush.msra.mxu0 %v1039
    %1396 = vmatpush.msra.mxu0 %v1037
    %1397 = vmatpush.msra.mxu0 %v1035
    %1398 = vmatpush.msra.mxu0 %v1033
    %1399 = vmatmul.f32.gmra.mxu0 %v1208
    %v1400 = vpop.f32.mrf.mxu0
    %v1401 = vadd.f32 %v1381, %v1400
    %1402 = vdwg.mxu0
    %1403 = vmatpush.msra.mxu0 %v1095
    %1404 = vmatpush.msra.mxu0 %v1093
    %1405 = vmatpush.msra.mxu0 %v1091
    %1406 = vmatpush.msra.mxu0 %v1089
    %1407 = vmatpush.msra.mxu0 %v1087
    %1408 = vmatpush.msra.mxu0 %v1085
    %1409 = vmatpush.msra.mxu0 %v1083
    %1410 = vmatpush.msra.mxu0 %v1081
    %1411 = vmatpush.msra.mxu0 %v1079
    %1412 = vmatpush.msra.mxu0 %v1077
    %1413 = vmatpush.msra.mxu0 %v1075
    %1414 = vmatpush.msra.mxu0 %v1073
    %1415 = vmatpush.msra.mxu0 %v1071
    %1416 = vmatpush.msra.mxu0 %v1069
    %1417 = vmatpush.msra.mxu0 %v1067
    %1418 = vmatpush.msra.mxu0 %v1065
    %1419 = vmatmul.f32.gmra.mxu0 %v1209
    %v1420 = vpop.f32.mrf.mxu0
    %v1421 = vadd.f32 %v1401, %v1420
    %1422 = vdwg.mxu0
    %1423 = vmatpush.msra.mxu0 %v1127
    %1424 = vmatpush.msra.mxu0 %v1125
    %1425 = vmatpush.msra.mxu0 %v1123
    %1426 = vmatpush.msra.mxu0 %v1121
    %1427 = vmatpush.msra.mxu0 %v1119
    %1428 = vmatpush.msra.mxu0 %v1117
    %1429 = vmatpush.msra.mxu0 %v1115
    %1430 = vmatpush.msra.mxu0 %v1113
    %1431 = vmatpush.msra.mxu0 %v1111
    %1432 = vmatpush.msra.mxu0 %v1109
    %1433 = vmatpush.msra.mxu0 %v1107
    %1434 = vmatpush.msra.mxu0 %v1105
    %1435 = vmatpush.msra.mxu0 %v1103
    %1436 = vmatpush.msra.mxu0 %v1101
    %1437 = vmatpush.msra.mxu0 %v1099
    %1438 = vmatpush.msra.mxu0 %v1097
    %1439 = vmatmul.f32.gmra.mxu0 %v1210
    %v1440 = vpop.f32.mrf.mxu0
    %v1441 = vadd.f32 %v1421, %v1440
    %1442 = vdwg.mxu0
    %1443 = vmatpush.msra.mxu0 %v1159
    %1444 = vmatpush.msra.mxu0 %v1157
    %1445 = vmatpush.msra.mxu0 %v1155
    %1446 = vmatpush.msra.mxu0 %v1153
    %1447 = vmatpush.msra.mxu0 %v1151
    %1448 = vmatpush.msra.mxu0 %v1149
    %1449 = vmatpush.msra.mxu0 %v1147
    %1450 = vmatpush.msra.mxu0 %v1145
    %1451 = vmatpush.msra.mxu0 %v1143
    %1452 = vmatpush.msra.mxu0 %v1141
    %1453 = vmatpush.msra.mxu0 %v1139
    %1454 = vmatpush.msra.mxu0 %v1137
    %1455 = vmatpush.msra.mxu0 %v1135
    %1456 = vmatpush.msra.mxu0 %v1133
    %1457 = vmatpush.msra.mxu0 %v1131
    %1458 = vmatpush.msra.mxu0 %v1129
    %1459 = vmatmul.f32.gmra.mxu0 %v1211
    %v1460 = vpop.f32.mrf.mxu0
    %v1461 = vadd.f32 %v1441, %v1460
    %1462 = vdwg.mxu0
    %1463 = vmatpush.msra.mxu0 %v1191
    %1464 = vmatpush.msra.mxu0 %v1189
    %1465 = vmatpush.msra.mxu0 %v1187
    %1466 = vmatpush.msra.mxu0 %v1185
    %1467 = vmatpush.msra.mxu0 %v1183
    %1468 = vmatpush.msra.mxu0 %v1181
    %1469 = vmatpush.msra.mxu0 %v1179
    %1470 = vmatpush.msra.mxu0 %v1177
    %1471 = vmatpush.msra.mxu0 %v1175
    %1472 = vmatpush.msra.mxu0 %v1173
    %1473 = vmatpush.msra.mxu0 %v1171
    %1474 = vmatpush.msra.mxu0 %v1169
    %1475 = vmatpush.msra.mxu0 %v1167
    %1476 = vmatpush.msra.mxu0 %v1165
    %1477 = vmatpush.msra.mxu0 %v1163
    %1478 = vmatpush.msra.mxu0 %v1161
    %1479 = vmatmul.f32.gmra.mxu0 %v1212
    %v1480 = vpop.f32.mrf.mxu0
    %v1481 = vadd.f32 %v1461, %v1480
    %1482 = vdwg.mxu0
    %1483 = vmatpush.msra.mxu0 0.0
    %1484 = vmatpush.msra.mxu0 0.0
    %1485 = vmatpush.msra.mxu0 0.0
    %1486 = vmatpush.msra.mxu0 0.0
    %1487 = vmatpush.msra.mxu0 0.0
    %1488 = vmatpush.msra.mxu0 0.0
    %1489 = vmatpush.msra.mxu0 0.0
    %1490 = vmatpush.msra.mxu0 0.0
    %1491 = vmatpush.msra.mxu0 0.0
    %1492 = vmatpush.msra.mxu0 0.0
    %1493 = vmatpush.msra.mxu0 0.0
    %1494 = vmatpush.msra.mxu0 0.0
    %1495 = vmatpush.msra.mxu0 0.0
    %1496 = vmatpush.msra.mxu0 0.0
    %1497 = vmatpush.msra.mxu0 %v1195
    %1498 = vmatpush.msra.mxu0 %v1193
    %1499 = vmatmul.f32.gmra.mxu0 %v1221
    %v1500 = vpop.f32.mrf.mxu0
    %v1501 = vadd.f32 %v1481, %v1500
    %1502 = vdwg.mxu0
    %v1505 = vrot.slane %v1501, 4
    %vm1506 = vcmask 1043456
    %v1507 = vsel %vm1506, %v1361, %v1505
    %vm1509 = vcmask 621572
    %vm1510 = vmor %vm1509, %vm1506
    %1511 = vst.msk [vmem:[#allocation3] sm:$0xff] %vm1510, %v1507
    %v1512 = vld [vmem:[#allocation3] sm:$0x1]
    %v1513 = vadd.f32 %v1512, 0.0
    %s1514 = vtos %v1513
    %v1516 = vperm.slane %v1512, 0
    %1517 = vrot.lane.b32.xlu0 %v1516, 127
    %v1518 = vpop.permute.xlu0 %1517
    %vm1520 = vcmask 155648
    %v1521 = vsel %vm1520, %v1518, 0.0
    %1522 = vadd.xlane.f32.xlu0 %v1521
    %v1523 = vpop.xlane.xlu0 %1522
    %v1524 = vrot.slane %v1523, 4
    %v1525 = vadd.f32 %v1523, %v1524
    %v1526 = vrot.slane %v1525, 2
    %v1527 = vadd.f32 %v1525, %v1526
    %v1528 = vrot.slane %v1527, 1
    %v1529 = vadd.f32 %v1527, %v1528
    %s1530 = vtos %v1529
    %1531 = vrot.lane.b32.xlu0 %v1516, 107
    %v1532 = vpop.permute.xlu0 %1531
    %vm1534 = vcmask 8192
    %v1535 = vsel %vm1534, %v1532, 0.0
    %1536 = vadd.xlane.f32.xlu0 %v1535
    %v1537 = vpop.xlane.xlu0 %1536
    %v1538 = vrot.slane %v1537, 4
    %v1539 = vadd.f32 %v1537, %v1538
    %v1540 = vrot.slane %v1539, 2
    %v1541 = vadd.f32 %v1539, %v1540
    %v1542 = vrot.slane %v1541, 1
    %v1543 = vadd.f32 %v1541, %v1542
    %s1544 = vtos %v1543
    %1545 = vrot.lane.b32.xlu0 %v1516, 105
    %v1546 = vpop.permute.xlu0 %1545
    %vm1548 = vcmask 106496
    %v1549 = vsel %vm1548, %v1546, 0.0
    %1550 = vadd.xlane.f32.xlu0 %v1549
    %v1551 = vpop.xlane.xlu0 %1550
    %v1552 = vrot.slane %v1551, 4
    %v1553 = vadd.f32 %v1551, %v1552
    %v1554 = vrot.slane %v1553, 2
    %v1555 = vadd.f32 %v1553, %v1554
    %v1556 = vrot.slane %v1555, 1
    %v1557 = vadd.f32 %v1555, %v1556
    %s1558 = vtos %v1557
    %1559 = vrot.lane.b32.xlu0 %v1516, 91
    %v1560 = vpop.permute.xlu0 %1559
    %v1562 = vsel %vm1548, %v1560, 0.0
    %1563 = vadd.xlane.f32.xlu0 %v1562
    %v1564 = vpop.xlane.xlu0 %1563
    %v1565 = vrot.slane %v1564, 4
    %v1566 = vadd.f32 %v1564, %v1565
    %v1567 = vrot.slane %v1566, 2
    %v1568 = vadd.f32 %v1566, %v1567
    %v1569 = vrot.slane %v1568, 1
    %v1570 = vadd.f32 %v1568, %v1569
    %s1571 = vtos %v1570
    %1573 = vrot.lane.b32.xlu0 %v1513, 77
    %v1574 = vpop.permute.xlu0 %1573
    %s1576 = vtos %v1574
    %1577 = vrot.lane.b32.xlu0 %v1516, 76
    %v1578 = vpop.permute.xlu0 %1577
    %v1580 = vsel %vm1520, %v1578, 0.0
    %1581 = vadd.xlane.f32.xlu0 %v1580
    %v1582 = vpop.xlane.xlu0 %1581
    %v1583 = vrot.slane %v1582, 4
    %v1584 = vadd.f32 %v1582, %v1583
    %v1585 = vrot.slane %v1584, 2
    %v1586 = vadd.f32 %v1584, %v1585
    %v1587 = vrot.slane %v1586, 1
    %v1588 = vadd.f32 %v1586, %v1587
    %s1589 = vtos %v1588
    %1590 = vrot.lane.b32.xlu0 %v1516, 56
    %v1591 = vpop.permute.xlu0 %1590
    %v1593 = vsel %vm1534, %v1591, 0.0
    %1594 = vadd.xlane.f32.xlu0 %v1593
    %v1595 = vpop.xlane.xlu0 %1594
    %v1596 = vrot.slane %v1595, 4
    %v1597 = vadd.f32 %v1595, %v1596
    %v1598 = vrot.slane %v1597, 2
    %v1599 = vadd.f32 %v1597, %v1598
    %v1600 = vrot.slane %v1599, 1
    %v1601 = vadd.f32 %v1599, %v1600
    %s1602 = vtos %v1601
    %1603 = vrot.lane.b32.xlu0 %v1516, 54
    %v1604 = vpop.permute.xlu0 %1603
    %v1606 = vsel %vm1548, %v1604, 0.0
    %1607 = vadd.xlane.f32.xlu0 %v1606
    %v1608 = vpop.xlane.xlu0 %1607
    %v1609 = vrot.slane %v1608, 4
    %v1610 = vadd.f32 %v1608, %v1609
    %v1611 = vrot.slane %v1610, 2
    %v1612 = vadd.f32 %v1610, %v1611
    %v1613 = vrot.slane %v1612, 1
    %v1614 = vadd.f32 %v1612, %v1613
    %s1615 = vtos %v1614
    %1616 = vrot.lane.b32.xlu0 %v1516, 40
    %v1617 = vpop.permute.xlu0 %1616
    %v1619 = vsel %vm1548, %v1617, 0.0
    %1620 = vadd.xlane.f32.xlu0 %v1619
    %v1621 = vpop.xlane.xlu0 %1620
    %v1622 = vrot.slane %v1621, 4
    %v1623 = vadd.f32 %v1621, %v1622
    %v1624 = vrot.slane %v1623, 2
    %v1625 = vadd.f32 %v1623, %v1624
    %v1626 = vrot.slane %v1625, 1
    %v1627 = vadd.f32 %v1625, %v1626
    %s1628 = vtos %v1627
    %v1629 = vld [vmem:[#allocation3 + $0x1] sm:$0x1]
    %v1630 = vadd.f32 %v1629, 0.0
    %1632 = vrot.lane.b32.xlu0 %v1630, 26
    %v1633 = vpop.permute.xlu0 %1632
    %s1635 = vtos %v1633
    %v1637 = vperm.slane %v1629, 0
    %1638 = vrot.lane.b32.xlu0 %v1637, 25
    %v1639 = vpop.permute.xlu0 %1638
    %v1641 = vsel %vm1520, %v1639, 0.0
    %1642 = vadd.xlane.f32.xlu0 %v1641
    %v1643 = vpop.xlane.xlu0 %1642
    %v1644 = vrot.slane %v1643, 4
    %v1645 = vadd.f32 %v1643, %v1644
    %v1646 = vrot.slane %v1645, 2
    %v1647 = vadd.f32 %v1645, %v1646
    %v1648 = vrot.slane %v1647, 1
    %v1649 = vadd.f32 %v1647, %v1648
    %s1650 = vtos %v1649
    %1651 = vrot.lane.b32.xlu0 %v1637, 5
    %v1652 = vpop.permute.xlu0 %1651
    %v1654 = vsel %vm1534, %v1652, 0.0
    %1655 = vadd.xlane.f32.xlu0 %v1654
    %v1656 = vpop.xlane.xlu0 %1655
    %v1657 = vrot.slane %v1656, 4
    %v1658 = vadd.f32 %v1656, %v1657
    %v1659 = vrot.slane %v1658, 2
    %v1660 = vadd.f32 %v1658, %v1659
    %v1661 = vrot.slane %v1660, 1
    %v1662 = vadd.f32 %v1660, %v1661
    %s1663 = vtos %v1662
    %v1664 = vld [vmem:[#allocation3 + $0x1] sm:$0x11]
    %v1666 = vperm.slane %v1664, 0
    %v1667 = vperm.slane %v1664, 4
    %1668 = vrot.lane.b32.xlu0 %v1666, 3
    %v1669 = vpop.permute.xlu0 %1668
    %1670 = vrot.lane.b32.xlu0 %v1667, 3
    %v1671 = vpop.permute.xlu0 %1670
    %vm1672 = vcmask 23552
    %v1673 = vsel %vm1672, %v1669, %v1671
    %v1675 = vsel %vm1548, %v1673, 0.0
    %1676 = vadd.xlane.f32.xlu0 %v1675
    %v1677 = vpop.xlane.xlu0 %1676
    %v1678 = vrot.slane %v1677, 4
    %v1679 = vadd.f32 %v1677, %v1678
    %v1680 = vrot.slane %v1679, 2
    %v1681 = vadd.f32 %v1679, %v1680
    %v1682 = vrot.slane %v1681, 1
    %v1683 = vadd.f32 %v1681, %v1682
    %s1684 = vtos %v1683
    %v1685 = vld [vmem:[#allocation3 + $0x5] sm:$0x1]
    %v1687 = vperm.slane %v1685, 0
    %1688 = vrot.lane.b32.xlu0 %v1687, 117
    %v1689 = vpop.permute.xlu0 %1688
    %v1691 = vsel %vm1548, %v1689, 0.0
    %1692 = vadd.xlane.f32.xlu0 %v1691
    %v1693 = vpop.xlane.xlu0 %1692
    %v1694 = vrot.slane %v1693, 4
    %v1695 = vadd.f32 %v1693, %v1694
    %v1696 = vrot.slane %v1695, 2
    %v1697 = vadd.f32 %v1695, %v1696
    %v1698 = vrot.slane %v1697, 1
    %v1699 = vadd.f32 %v1697, %v1698
    %s1700 = vtos %v1699
    %v1701 = vadd.f32 %v1685, 0.0
    %1703 = vrot.lane.b32.xlu0 %v1701, 103
    %v1704 = vpop.permute.xlu0 %1703
    %s1706 = vtos %v1704
    %1707 = vrot.lane.b32.xlu0 %v1687, 102
    %v1708 = vpop.permute.xlu0 %1707
    %v1710 = vsel %vm1520, %v1708, 0.0
    %1711 = vadd.xlane.f32.xlu0 %v1710
    %v1712 = vpop.xlane.xlu0 %1711
    %v1713 = vrot.slane %v1712, 4
    %v1714 = vadd.f32 %v1712, %v1713
    %v1715 = vrot.slane %v1714, 2
    %v1716 = vadd.f32 %v1714, %v1715
    %v1717 = vrot.slane %v1716, 1
    %v1718 = vadd.f32 %v1716, %v1717
    %s1719 = vtos %v1718
    %1720 = vrot.lane.b32.xlu0 %v1687, 82
    %v1721 = vpop.permute.xlu0 %1720
    %v1723 = vsel %vm1534, %v1721, 0.0
    %1724 = vadd.xlane.f32.xlu0 %v1723
    %v1725 = vpop.xlane.xlu0 %1724
    %v1726 = vrot.slane %v1725, 4
    %v1727 = vadd.f32 %v1725, %v1726
    %v1728 = vrot.slane %v1727, 2
    %v1729 = vadd.f32 %v1727, %v1728
    %v1730 = vrot.slane %v1729, 1
    %v1731 = vadd.f32 %v1729, %v1730
    %s1732 = vtos %v1731
    %1733 = vrot.lane.b32.xlu0 %v1687, 80
    %v1734 = vpop.permute.xlu0 %1733
    %v1736 = vsel %vm1548, %v1734, 0.0
    %1737 = vadd.xlane.f32.xlu0 %v1736
    %v1738 = vpop.xlane.xlu0 %1737
    %v1739 = vrot.slane %v1738, 4
    %v1740 = vadd.f32 %v1738, %v1739
    %v1741 = vrot.slane %v1740, 2
    %v1742 = vadd.f32 %v1740, %v1741
    %v1743 = vrot.slane %v1742, 1
    %v1744 = vadd.f32 %v1742, %v1743
    %s1745 = vtos %v1744
    %1746 = vrot.lane.b32.xlu0 %v1687, 66
    %v1747 = vpop.permute.xlu0 %1746
    %v1749 = vsel %vm1548, %v1747, 0.0
    %1750 = vadd.xlane.f32.xlu0 %v1749
    %v1751 = vpop.xlane.xlu0 %1750
    %v1752 = vrot.slane %v1751, 4
    %v1753 = vadd.f32 %v1751, %v1752
    %v1754 = vrot.slane %v1753, 2
    %v1755 = vadd.f32 %v1753, %v1754
    %v1756 = vrot.slane %v1755, 1
    %v1757 = vadd.f32 %v1755, %v1756
    %s1758 = vtos %v1757
    %v1759 = vld [vmem:[#allocation3 + $0x2] sm:$0x1]
    %v1760 = vadd.f32 %v1759, 0.0
    %s1761 = vtos %v1760
    %1763 = vrot.lane.b32.xlu0 %v1760, 77
    %v1764 = vpop.permute.xlu0 %1763
    %s1766 = vtos %v1764
    %s1767 = sadd.f32 %s1761, %s1766
    %v1768 = vld [vmem:[#allocation3 + $0x3] sm:$0x1]
    %v1769 = vadd.f32 %v1768, 0.0
    %1771 = vrot.lane.b32.xlu0 %v1769, 26
    %v1772 = vpop.permute.xlu0 %1771
    %s1774 = vtos %v1772
    %s1775 = sadd.f32 %s1514, %s1576
    %s1776 = sadd.f32 %s1775, %s1635
    %s1777 = sadd.f32 %s1776, %s1706
    %s1778 = sadd.f32 %s1530, %s1589
    %s1779 = sadd.f32 %s1778, %s1650
    %s1780 = sadd.f32 %s1779, %s1719
    %s1781 = sadd.f32 %s1544, %s1602
    %s1782 = sadd.f32 %s1781, %s1663
    %s1783 = sadd.f32 %s1782, %s1732
    %s1784 = smul.f32 %s1783, 5.0
    %s1785 = sadd.f32 %s1558, %s1615
    %s1786 = sadd.f32 %s1785, %s1684
    %s1787 = sadd.f32 %s1786, %s1745
    %s1788 = sadd.f32 %s1571, %s1628
    %s1789 = sadd.f32 %s1788, %s1700
    %s1790 = sadd.f32 %s1789, %s1758
    %s1791 = sadd.f32 %s1787, %s1790
    %s1792 = sadd.f32 %s1777, %s1780
    %s1793 = sadd.f32 %s1792, %s1784
    %s1794 = sadd.f32 %s1793, %s1791
    %s1795 = smul.f32 %s1774, 2.0
    %s1796 = sadd.f32 %s1767, %s1795
    %s1797 = smul.f32 %s1796, 0.05
    %s1798 = sadd.f32 %s1794, %s1797
    %s1799 = smul.f32 %s1663, 5.0
    %s1800 = sadd.f32 %s1635, %s1799
    %s1801 = smul.f32 %s1800, 2.0
    %s1802 = smul.f32 %s1774, 0.1
    %s1803 = sadd.f32 %s1801, %s1802
    %s1804 = smul.f32 %s1635, 2.0
    %s1805 = smul.f32 %s1663, 10.0
    %s1806 = sadd.f32 %s1777, %s1797
    %s1807 = scalar_lea.smem [#allocation4], 0
    %1808 = sst [smem:[%s1807]] %s1777
    %s1809 = scalar_lea.smem [#allocation4], 1
    %1810 = sst [smem:[%s1809]] %s1780
    %s1811 = scalar_lea.smem [#allocation4], 2
    %1812 = sst [smem:[%s1811]] %s1784
    %s1813 = scalar_lea.smem [#allocation4], 3
    %1814 = sst [smem:[%s1813]] %s1791
    %s1815 = scalar_lea.smem [#allocation4], 4
    %1816 = sst [smem:[%s1815]] %s1794
    %s1817 = scalar_lea.smem [#allocation4], 5
    %1818 = sst [smem:[%s1817]] %s1796
    %s1819 = scalar_lea.smem [#allocation4], 6
    %1820 = sst [smem:[%s1819]] %s1806
    %s1821 = scalar_lea.smem [#allocation4], 7
    %1822 = sst [smem:[%s1821]] %s1803
    %s1823 = scalar_lea.smem [#allocation4], 8
    %1824 = sst [smem:[%s1823]] %s1804
    %s1825 = scalar_lea.smem [#allocation4], 9
    %1826 = sst [smem:[%s1825]] %s1795
    %s1827 = scalar_lea.smem [#allocation4], 10
    %1828 = sst [smem:[%s1827]] %s1805
    %s1829 = scalar_lea.smem [#allocation4], 11
    %1830 = sst [smem:[%s1829]] %s1798
    // Predicated region
    $region14: #{_loss_jit.1} parent=1 // pred_check
      _
    $region15: #{_loss_jit.1} parent=1 // pred_check_branch
      %1832 = sbr.rel (0) target = $region17
    $region16: #{_loss_jit.1} parent=1 // pred_region
      %1834 = vsyncadd [#allocation5], 0
      %s1836 = sshll.u32 %s3, 4
      %s1837 = int_to_ptr.hbm [resolvable:$true] %s1836
      %1839 = dma.smem_to_hbm [#allocation4], 16, %s1837, [#allocation5]
    $region17: #{_loss_jit.1} parent=1 // pred_fallthru
      _
    // Predicated region
    $region18: #{_loss_jit.1} parent=1 // pred_check
      _
    $region19: #{_loss_jit.1} parent=1 // pred_check_branch
      %1841 = sbr.rel (0) target = $region21
    $region20: #{_loss_jit.1} parent=1 // pred_region
      %1843 = dma.done [#allocation5], 16
    $region21: #{_loss_jit.1} parent=1 // pred_fallthru
      _
    %1844 = sfence
    %1845 = vsyncpa [#allocation5], 1

</llo_original>
